<compile_context>
chip_gen: v7x
topology: tpu7x:2x2x1
jax: 0.10.0
libtpu: 0.0.40
codegen_flags: <defaults>
</compile_context>

<pallas_src>
import jax
import jax.numpy as jnp
from jax.experimental import pallas as pl
from jax.experimental.pallas import tpu as pltpu

IN_DIM = 2151
HID_DIM = 200
HID_PAD = 256      # hidden dim padded to a lane-/MXU-friendly multiple of 128
OUT_DIM = 1


def _round_up(n: int, m: int) -> int:
    return ((n + m - 1) // m) * m


def mlp_kernel(x_ref, w1_ref, b1_ref, w2_ref, b2_ref, o_ref):
    # x arrives f32 from HBM (no wrapper cast); pack to bf16 on the VPU just before
    # the MXU. W1 is already bf16 and stays resident (index_map -> (0,0) every step).
    a = x_ref[...].astype(jnp.bfloat16)                          # (TB, 2151) bf16
    h = jnp.dot(a, w1_ref[...], preferred_element_type=jnp.float32)  # (TB, 256) f32
    # f32 epilogue on the VPU (bias + ReLU). Padded hidden cols stay exactly 0.
    h = jnp.maximum(h + b1_ref[...], 0.0)
    # fc2 has N=1: VPU multiply + cross-lane (XLU) reduction instead of a 1-lane
    # MXU pass. w2_ref is the weight row laid out as (1, HID_PAD), zeros in the pad.
    out = jnp.sum(h * w2_ref[...], axis=-1, keepdims=True) + b2_ref[...]
    # NOTE(synk): output stays (TB, 1) to preserve the module's (B, 1) layout; the
    # lane-dense-output trick would need an in-kernel transpose that costs more
    # than the ~TB*4 bytes of masked stores it saves here.
    o_ref[...] = out.astype(o_ref.dtype)


def linear_model_forward(x, w1_bf, b1_f, w2_row, b2_f, *, block_b: int = 1024):
    """Forward pass. Params must come from prepare_params()/init_params().

    x:      (B, 2151) f32
    w1_bf:  (2151, 256) bf16   (hidden padded with zero columns)
    b1_f:   (1, 256)   f32     (zeros in the pad)
    w2_row: (1, 256)   f32     (zeros in the pad)
    b2_f:   (1, 1)     f32
    """
    B = x.shape[0]

    # Batch tile: multiple of 8 (f32 sublane rule), capped by block_b, and sized so
    # there are >= 2 grid tiles whenever B allows (keeps both v7x TensorCores fed).
    tb = min(block_b, max(8, _round_up(pl.cdiv(B, 2), 8)))
    num_tiles = pl.cdiv(B, tb)   # no jnp.pad: boundary block's stores are masked

    flops = 2 * B * IN_DIM * HID_PAD + 3 * B * HID_PAD
    bytes_accessed = (
        B * IN_DIM * 4            # x read as f32 (cast to bf16 in-kernel)
        + IN_DIM * HID_PAD * 2    # W1 (bf16), loaded once (resident)
        + HID_PAD * 4 * 2         # b1 + w2 row (f32), loaded once
        + 4                       # b2
        + B * OUT_DIM * 4         # output (f32)
    )

    out = pl.pallas_call(
        mlp_kernel,
        out_shape=jax.ShapeDtypeStruct((B, OUT_DIM), jnp.float32),
        grid=(num_tiles,),
        in_specs=[
            pl.BlockSpec((tb, IN_DIM), lambda i: (i, 0)),          # x tile, pipelined
            pl.BlockSpec((IN_DIM, HID_PAD), lambda i: (0, 0)),     # W1 resident
            pl.BlockSpec((1, HID_PAD), lambda i: (0, 0)),          # b1 resident
            pl.BlockSpec((1, HID_PAD), lambda i: (0, 0)),          # w2 row resident
            pl.BlockSpec((1, OUT_DIM), lambda i: (0, 0)),          # b2 resident
        ],
        out_specs=pl.BlockSpec((tb, OUT_DIM), lambda i: (i, 0)),
        compiler_params=pltpu.CompilerParams(
            dimension_semantics=("parallel",),                     # megacore on v7x
            # tb=1024: ~8.4 MiB per f32 x tile, x2 buffers + ~2 MiB weights/h; fits
            # tb=2048 too. Well inside v7x's 64 MiB per-TC VMEM.
            vmem_limit_bytes=48 * 1024 * 1024,
        ),
        cost_estimate=pl.CostEstimate(
            flops=flops, transcendentals=0, bytes_accessed=bytes_accessed),
    )(x, w1_bf, b1_f, w2_row, b2_f)

    return out


def prepare_params(w1, b1, w2, b2):
    """One-time param prep (call at init, NOT in the forward hot path).

    w1: (2151, 200) f32, b1: (200,) or (1,200) f32,
    w2: (200, 1) f32,    b2: (1,) or (1,1) f32.
    Pads hidden 200->256 with zeros (exact: zero w2/b1 pad entries), casts W1 to
    bf16 for the MXU, lays out w2 as a (1, 256) row for the VPU+XLU epilogue.
    """
    pad = HID_PAD - HID_DIM
    w1_bf = jnp.pad(w1, ((0, 0), (0, pad))).astype(jnp.bfloat16)
    b1_f = jnp.pad(jnp.reshape(b1, (1, HID_DIM)).astype(jnp.float32),
                   ((0, 0), (0, pad)))
    w2_row = jnp.pad(jnp.reshape(w2, (1, HID_DIM)).astype(jnp.float32),
                     ((0, 0), (0, pad)))
    b2_f = jnp.reshape(b2, (1, OUT_DIM)).astype(jnp.float32)
    return w1_bf, b1_f, w2_row, b2_f


def init_params(key):
    """Deterministic init mimicking nn.Linear's uniform(-1/sqrt(fan_in), 1/sqrt(fan_in)).

    Returns the raw f32 params (PyTorch semantics, (in, out) layout).
    """
    k1, k2, k3, k4 = jax.random.split(key, 4)
    bound1 = 1.0 / jnp.sqrt(IN_DIM)
    bound2 = 1.0 / jnp.sqrt(HID_DIM)
    w1 = jax.random.uniform(k1, (IN_DIM, HID_DIM), jnp.float32, -bound1, bound1)
    b1 = jax.random.uniform(k2, (1, HID_DIM), jnp.float32, -bound1, bound1)
    w2 = jax.random.uniform(k3, (HID_DIM, OUT_DIM), jnp.float32, -bound2, bound2)
    b2 = jax.random.uniform(k4, (1, OUT_DIM), jnp.float32, -bound2, bound2)
    return w1, b1, w2, b2


if __name__ == "__main__":
    key = jax.random.PRNGKey(0)
    kx, kp = jax.random.split(key)

    B = 20  # small batch, deliberately not a multiple of the tile size
    x = jax.random.normal(kx, (B, IN_DIM), jnp.float32)
    w1, b1, w2, b2 = init_params(kp)

    # One-time prep outside the hot path (bf16 cast, hidden pad, row layout).
    params = prepare_params(w1, b1, w2, b2)

    # With B=20: tb = 16 -> 2 grid steps, last block exercises masked boundary stores.
    out = linear_model_forward(x, *params, block_b=1024)
    out = jax.block_until_ready(out)
    assert out.shape == (B, OUT_DIM)

    # Reference 1: same bf16-rounded MXU operands, f32 math -> tight tolerance.
    x_r = x.astype(jnp.bfloat16).astype(jnp.float32)
    w1_r = w1.astype(jnp.bfloat16).astype(jnp.float32)
    ref_bf16 = jnp.maximum(x_r @ w1_r + b1, 0.0) @ w2 + b2
    assert jnp.allclose(out, ref_bf16, atol=1e-3, rtol=1e-3)

    # Reference 2: full-f32 forward of the original module -> loose (bf16) tolerance.
    ref_f32 = jnp.maximum(x @ w1 + b1, 0.0) @ w2 + b2
    assert jnp.allclose(out, ref_f32, atol=2e-2, rtol=2e-2)

    print("KERNEL_OK")
</pallas_src>

<mosaic_0001>
module attributes {stable_mosaic.version = 11 : i64} {
  func.func @mlp_kernel(%arg0: i32, %arg1: memref<16x2151xf32, #tpu.memory_space<vmem>>, %arg2: memref<2151x256xbf16, #tpu.memory_space<vmem>>, %arg3: memref<1x256xf32, #tpu.memory_space<vmem>>, %arg4: memref<1x256xf32, #tpu.memory_space<vmem>>, %arg5: memref<1x1xf32, #tpu.memory_space<vmem>>, %arg6: memref<16x1xf32, #tpu.memory_space<vmem>>) attributes {dimension_semantics = [#tpu.dimension_semantics<parallel>], iteration_bounds = array<i64: 2>, scalar_prefetch = 0 : i64, scratch_operands = 0 : i64, tpu.core_type = #tpu.core_type<tc>, window_params = [{transform_indices = @transform_0, window_bounds = array<i64: 16, 2151>}, {pipeline_mode = #tpu.pipeline_mode<synchronous>, transform_indices = @transform_1, window_bounds = array<i64: 2151, 256>}, {pipeline_mode = #tpu.pipeline_mode<synchronous>, transform_indices = @transform_2, window_bounds = array<i64: 1, 256>}, {pipeline_mode = #tpu.pipeline_mode<synchronous>, transform_indices = @transform_3, window_bounds = array<i64: 1, 256>}, {pipeline_mode = #tpu.pipeline_mode<synchronous>, transform_indices = @transform_4, window_bounds = array<i64: 1, 1>}, {transform_indices = @transform_5, window_bounds = array<i64: 16, 1>}]} {
    %c0 = arith.constant 0 : index
    %c0_0 = arith.constant 0 : index
    %0 = vector.load %arg1[%c0, %c0_0] : memref<16x2151xf32, #tpu.memory_space<vmem>>, vector<16x2151xf32>
    %1 = arith.truncf %0 : vector<16x2151xf32> to vector<16x2151xbf16>
    %c0_1 = arith.constant 0 : index
    %c0_2 = arith.constant 0 : index
    %2 = vector.load %arg2[%c0_1, %c0_2] : memref<2151x256xbf16, #tpu.memory_space<vmem>>, vector<2151x256xbf16>
    %cst = arith.constant dense<0.000000e+00> : vector<16x256xf32>
    %3 = tpu.matmul %1, %2, %cst {dimension_numbers = #tpu.dot_dimension_numbers<[1], [0], [0], [1], [0, 0, 1, 1], [], []>} : vector<16x2151xbf16>, vector<2151x256xbf16>, vector<16x256xf32> -> vector<16x256xf32>
    %c0_3 = arith.constant 0 : index
    %c0_4 = arith.constant 0 : index
    %4 = vector.load %arg3[%c0_3, %c0_4] : memref<1x256xf32, #tpu.memory_space<vmem>>, vector<1x256xf32>
    %5 = vector.broadcast %4 : vector<1x256xf32> to vector<16x256xf32>
    %6 = arith.addf %3, %5 : vector<16x256xf32>
    %cst_5 = arith.constant 0.000000e+00 : f32
    %7 = vector.broadcast %cst_5 : f32 to vector<16x256xf32>
    %8 = arith.maximumf %6, %7 : vector<16x256xf32>
    %c0_6 = arith.constant 0 : index
    %c0_7 = arith.constant 0 : index
    %9 = vector.load %arg4[%c0_6, %c0_7] : memref<1x256xf32, #tpu.memory_space<vmem>>, vector<1x256xf32>
    %10 = vector.broadcast %9 : vector<1x256xf32> to vector<16x256xf32>
    %11 = arith.mulf %8, %10 : vector<16x256xf32>
    %cst_8 = arith.constant dense<0.000000e+00> : vector<16xf32>
    %12 = vector.multi_reduction <add>, %11, %cst_8 [1] : vector<16x256xf32> to vector<16xf32>
    %13 = vector.shape_cast %12 : vector<16xf32> to vector<16x1xf32>
    %c0_9 = arith.constant 0 : index
    %c0_10 = arith.constant 0 : index
    %14 = vector.load %arg5[%c0_9, %c0_10] : memref<1x1xf32, #tpu.memory_space<vmem>>, vector<1x1xf32>
    %15 = vector.broadcast %14 : vector<1x1xf32> to vector<16x1xf32>
    %16 = arith.addf %13, %15 : vector<16x1xf32>
    %c0_11 = arith.constant 0 : index
    %c0_12 = arith.constant 0 : index
    %17 = vector.load %arg6[%c0_11, %c0_12] : memref<16x1xf32, #tpu.memory_space<vmem>>, vector<16x1xf32>
    tpu.vector_store %arg6[%c0_11, %c0_12], %16 {strides = array<i32>} : memref<16x1xf32, #tpu.memory_space<vmem>>, vector<16x1xf32>,
    return
  }
  func.func @transform_0(%arg0: i32) -> (i32, i32) {
    %c0_i32 = arith.constant 0 : i32
    %c0_i32_0 = arith.constant 0 : i32
    return %arg0, %c0_i32 : i32, i32
  }
  func.func @transform_1(%arg0: i32) -> (i32, i32) {
    %c0_i32 = arith.constant 0 : i32
    %c0_i32_0 = arith.constant 0 : i32
    %c0_i32_1 = arith.constant 0 : i32
    return %c0_i32, %c0_i32_0 : i32, i32
  }
  func.func @transform_2(%arg0: i32) -> (i32, i32) {
    %c0_i32 = arith.constant 0 : i32
    %c0_i32_0 = arith.constant 0 : i32
    %c0_i32_1 = arith.constant 0 : i32
    return %c0_i32, %c0_i32_0 : i32, i32
  }
  func.func @transform_3(%arg0: i32) -> (i32, i32) {
    %c0_i32 = arith.constant 0 : i32
    %c0_i32_0 = arith.constant 0 : i32
    %c0_i32_1 = arith.constant 0 : i32
    return %c0_i32, %c0_i32_0 : i32, i32
  }
  func.func @transform_4(%arg0: i32) -> (i32, i32) {
    %c0_i32 = arith.constant 0 : i32
    %c0_i32_0 = arith.constant 0 : i32
    %c0_i32_1 = arith.constant 0 : i32
    return %c0_i32, %c0_i32_0 : i32, i32
  }
  func.func @transform_5(%arg0: i32) -> (i32, i32) {
    %c0_i32 = arith.constant 0 : i32
    %c0_i32_0 = arith.constant 0 : i32
    return %arg0, %c0_i32 : i32, i32
  }
}

</mosaic_0001>

<llo_original>
// kernel: tpu_custom_call.1
$region0: #{tpu_custom_call.1}
  #allocation0 [shape = 'u32[]', space=smem, size = 0x4, offset = 0x4, fixed_abs, tag = 'smem constant byte address 0x4 - core index']
  #allocation1 [shape = 'u32[144,128]{1,0:T(1,128)}', space=vmem, size = 0x12000, scoped, tag = 'internal scratch']
  #allocation2 [shape = 'f32[1,1]{1,0:T(1,128)S(1)}', space=vmem, size = 0x200, scoped, tag = 'scoped memory for tpu_custom_call.1']
  %s0 = inlined_call_operand.hbm [shape: f32[20,2151], index: 0, kind: input, shape index: {}]
  %s1 = inlined_call_operand.hbm [shape: bf16[2151,256], index: 1, kind: input, shape index: {}]
  %s2 = inlined_call_operand.hbm [shape: f32[1,256], index: 2, kind: input, shape index: {}]
  %s3 = inlined_call_operand.hbm [shape: f32[1,256], index: 3, kind: input, shape index: {}]
  %s4 = inlined_call_operand.<no memory space> [shape: f32[1,1], index: 4, kind: input, shape index: {}]
  %s5 = inlined_call_operand.vmem [shape: f32[20,1], index: 5, kind: output, shape index: {}]
  %s6 = sld [smem:[#allocation0]]
  $region117: #{tpu_custom_call.1} parent=0
    _
  %s8 = ssub.s32 1, %s6
  %s9 = scalar_select 0, %s8, %s6
  %v10 = vstv %s4
  %11 = vst [vmem:[#allocation2] sm:$0x1] %v10
  $region1: #{tpu_custom_call.1} parent=0
    #allocation3 [shape = 'u8[278528]{0}', space=vmem, size = 0x44000, scoped, tag = 'input window, operand 0']
    #allocation4 [shape = 's32[2]{0}', space=sflag, size = 0x8, scoped, tag = 'scoped memory for tpu_custom_call.1']
    #allocation5 [shape = 'u8[1101824]{0}', space=vmem, size = 0x10d000, scoped, tag = 'input window, operand 1, single buffered']
    #allocation6 [shape = 's32[1]{0}', space=sflag, size = 0x4, scoped, tag = 'scoped memory for tpu_custom_call.1']
    #allocation7 [shape = 'u8[1024]{0}', space=vmem, size = 0x400, scoped, tag = 'input window, operand 2, single buffered']
    #allocation8 [shape = 'u8[1024]{0}', space=vmem, size = 0x400, scoped, tag = 'input window, operand 3, single buffered']
    #allocation9 [shape = 's32[1]{0}', space=sflag, size = 0x4, scoped, tag = 'scoped memory for tpu_custom_call.1']
    #allocation10 [shape = 'u8[16384]{0}', space=vmem, size = 0x4000, scoped, tag = 'output window, operand 0']
    %12 = vsyncpa [#allocation4], 0
    %s13 = scalar_lea.sflag [#allocation4], 1
    %14 = vsyncpa %s13, 0
    %15 = vsyncpa [#allocation6], 0
    %16 = vsyncpa [#allocation9], 0
    loop: start=0, step=1, limit=4
    $region2: #{tpu_custom_call.1} parent=1 // loop_pre_header
      _
    $region3: #{tpu_custom_call.1} parent=1 // loop_header
      %s18 = sphi 0, %s22
      %p19 = scmp.ge.s32.totalorder %s18, 4
      %s28 = sphi 0, %s30
      %s31 = sphi 0, %s28
      %s32 = sphi 0, %s31
      %s48 = sphi 0, %s32
      %s52 = sphi 0, %s52
      %s54 = sphi 0, %s52
      %s55 = sphi 0, %s54
      %s69 = sphi 0, %s55
      %s73 = sphi 0, %s73
      %s75 = sphi 0, %s73
      %s76 = sphi 0, %s75
      %s90 = sphi 0, %s76
      %s94 = sphi 0, %s94
      %s96 = sphi 0, %s94
      %s97 = sphi 0, %s96
      %s111 = sphi 0, %s97
      %s115 = sphi 0, %s115
      %s117 = sphi 0, %s115
      %s118 = sphi 0, %s117
      %s132 = sphi 0, %s118
      %s138 = sphi 0, %s140
      %s141 = sphi 0, %s138
      %s142 = sphi 0, %s141
      %s158 = sphi 0, %s142
    $region4: #{tpu_custom_call.1} parent=1 // loop_header_branch
      %21 = sbr.rel (%p19) target = $region8
    $region5: #{tpu_custom_call.1} parent=1 // loop_body
      %s23 = ssub.s32 %s18, 1
      %s24 = ssub.s32 %s18, 2
      %s25 = sadd.s32 %s18, 1
      %s26 = ssub.s32 %s18, %s25
      %p27 = scmp.eq.s32.totalorder %s26, 0
      %s29 = sadd.s32 %s28, 1
      %s30 = scalar_select %p27, %s28, %s29
      %p33 = pneg %p27
      %p34 = scmp.eq.s32.totalorder %s18, 1
      %p35 = por %p33, %p34
      %p36 = scmp.ne.s32.totalorder %s28, %s31
      %p37 = scmp.eq.s32.totalorder %s18, 0
      %p38 = por %p36, %p37
      %p39 = scmp.ne.s32.totalorder %s28, %s31
      %p40 = scmp.eq.s32.totalorder %s23, 1
      %p41 = por %p39, %p40
      %p42 = scmp.ne.s32.totalorder %s31, %s32
      %p43 = scmp.eq.s32.totalorder %s23, 0
      %p44 = por %p42, %p43
      %p45 = scmp.ne.s32.totalorder %s31, %s32
      %p46 = scmp.eq.s32.totalorder %s24, 1
      %p47 = por %p45, %p46
      %p49 = scmp.ne.s32.totalorder %s32, %s48
      %p50 = scmp.eq.s32.totalorder %s24, 0
      %p51 = por %p49, %p50
      %s53 = sadd.s32 %s52, 1
      %p56 = scmp.eq.s32.totalorder %s18, 1
      %p57 = scmp.ne.s32.totalorder %s52, %s54
      %p58 = scmp.eq.s32.totalorder %s18, 0
      %p59 = por %p57, %p58
      %p60 = scmp.ne.s32.totalorder %s52, %s54
      %p61 = scmp.eq.s32.totalorder %s23, 1
      %p62 = por %p60, %p61
      %p63 = scmp.ne.s32.totalorder %s54, %s55
      %p64 = scmp.eq.s32.totalorder %s23, 0
      %p65 = por %p63, %p64
      %p66 = scmp.ne.s32.totalorder %s54, %s55
      %p67 = scmp.eq.s32.totalorder %s24, 1
      %p68 = por %p66, %p67
      %p70 = scmp.ne.s32.totalorder %s55, %s69
      %p71 = scmp.eq.s32.totalorder %s24, 0
      %p72 = por %p70, %p71
      %s74 = sadd.s32 %s73, 1
      %p77 = scmp.eq.s32.totalorder %s18, 1
      %p78 = scmp.ne.s32.totalorder %s73, %s75
      %p79 = scmp.eq.s32.totalorder %s18, 0
      %p80 = por %p78, %p79
      %p81 = scmp.ne.s32.totalorder %s73, %s75
      %p82 = scmp.eq.s32.totalorder %s23, 1
      %p83 = por %p81, %p82
      %p84 = scmp.ne.s32.totalorder %s75, %s76
      %p85 = scmp.eq.s32.totalorder %s23, 0
      %p86 = por %p84, %p85
      %p87 = scmp.ne.s32.totalorder %s75, %s76
      %p88 = scmp.eq.s32.totalorder %s24, 1
      %p89 = por %p87, %p88
      %p91 = scmp.ne.s32.totalorder %s76, %s90
      %p92 = scmp.eq.s32.totalorder %s24, 0
      %p93 = por %p91, %p92
      %s95 = sadd.s32 %s94, 1
      %p98 = scmp.eq.s32.totalorder %s18, 1
      %p99 = scmp.ne.s32.totalorder %s94, %s96
      %p100 = scmp.eq.s32.totalorder %s18, 0
      %p101 = por %p99, %p100
      %p102 = scmp.ne.s32.totalorder %s94, %s96
      %p103 = scmp.eq.s32.totalorder %s23, 1
      %p104 = por %p102, %p103
      %p105 = scmp.ne.s32.totalorder %s96, %s97
      %p106 = scmp.eq.s32.totalorder %s23, 0
      %p107 = por %p105, %p106
      %p108 = scmp.ne.s32.totalorder %s96, %s97
      %p109 = scmp.eq.s32.totalorder %s24, 1
      %p110 = por %p108, %p109
      %p112 = scmp.ne.s32.totalorder %s97, %s111
      %p113 = scmp.eq.s32.totalorder %s24, 0
      %p114 = por %p112, %p113
      %s116 = sadd.s32 %s115, 1
      %p119 = scmp.eq.s32.totalorder %s18, 1
      %p120 = scmp.ne.s32.totalorder %s115, %s117
      %p121 = scmp.eq.s32.totalorder %s18, 0
      %p122 = por %p120, %p121
      %p123 = scmp.ne.s32.totalorder %s115, %s117
      %p124 = scmp.eq.s32.totalorder %s23, 1
      %p125 = por %p123, %p124
      %p126 = scmp.ne.s32.totalorder %s117, %s118
      %p127 = scmp.eq.s32.totalorder %s23, 0
      %p128 = por %p126, %p127
      %p129 = scmp.ne.s32.totalorder %s117, %s118
      %p130 = scmp.eq.s32.totalorder %s24, 1
      %p131 = por %p129, %p130
      %p133 = scmp.ne.s32.totalorder %s118, %s132
      %p134 = scmp.eq.s32.totalorder %s24, 0
      %p135 = por %p133, %p134
      %s136 = ssub.s32 %s18, %s25
      %p137 = scmp.eq.s32.totalorder %s136, 0
      %s139 = sadd.s32 %s138, 1
      %s140 = scalar_select %p137, %s138, %s139
      %p143 = pneg %p137
      %p144 = scmp.eq.s32.totalorder %s18, 1
      %p145 = por %p143, %p144
      %p146 = scmp.ne.s32.totalorder %s138, %s141
      %p147 = scmp.eq.s32.totalorder %s18, 0
      %p148 = por %p146, %p147
      %p149 = scmp.ne.s32.totalorder %s138, %s141
      %p150 = scmp.eq.s32.totalorder %s23, 1
      %p151 = por %p149, %p150
      %p152 = scmp.ne.s32.totalorder %s141, %s142
      %p153 = scmp.eq.s32.totalorder %s23, 0
      %p154 = por %p152, %p153
      %p155 = scmp.ne.s32.totalorder %s141, %s142
      %p156 = scmp.eq.s32.totalorder %s24, 1
      %p157 = por %p155, %p156
      %p159 = scmp.ne.s32.totalorder %s142, %s158
      %p160 = scmp.eq.s32.totalorder %s24, 0
      %p161 = por %p159, %p160
      %p162 = scmp.le.s32.totalorder 1, %s18
      %p163 = scmp.lt.s32.totalorder %s18, 3
      %p164 = pnand %p162, %p163
      %p165 = pneg %p164
      // Predicated region
      $region9: #{tpu_custom_call.1} parent=5 // pred_check
        _
      $region10: #{tpu_custom_call.1} parent=5 // pred_check_branch
        %167 = sbr.rel (%p164) target = $region12
      $region11: #{tpu_custom_call.1} parent=5 // pred_region
        %s168 = ssub.s32 %s18, 1
        // Predicated region
        $region13: #{tpu_custom_call.1} parent=11 // pred_check
          %p169 = pneg %p65
        $region14: #{tpu_custom_call.1} parent=11 // pred_check_branch
          %171 = sbr.rel (%p169) target = $region16
        $region15: #{tpu_custom_call.1} parent=11 // pred_region
          %s173 = ssub.s32 34432, 34432
          %174 = vsyncadd [#allocation6], %s173
          %s175 = sshll.u32 [#allocation5], 4
          %s176 = int_to_ptr.vmem [resolvable:$true] %s175
          %181 = dma.hbm_to_vmem [thread:$0]  %s1, 34432, %s176, [#allocation6], 128, 128, 8
        $region16: #{tpu_custom_call.1} parent=11 // pred_fallthru
          _
        // Predicated region
        $region17: #{tpu_custom_call.1} parent=11 // pred_check
          %p182 = pneg %p86
        $region18: #{tpu_custom_call.1} parent=11 // pred_check_branch
          %184 = sbr.rel (%p182) target = $region20
        $region19: #{tpu_custom_call.1} parent=11 // pred_region
          %s186 = ssub.s32 32, 32
          %187 = vsyncadd [#allocation6], %s186
          %s189 = sshll.u32 [#allocation7], 4
          %s190 = int_to_ptr.vmem [resolvable:$true] %s189
          %192 = dma.hbm_to_vmem [thread:$0]  %s2, 32, %s190, [#allocation6]
        $region20: #{tpu_custom_call.1} parent=11 // pred_fallthru
          _
        // Predicated region
        $region21: #{tpu_custom_call.1} parent=11 // pred_check
          %p193 = pneg %p107
        $region22: #{tpu_custom_call.1} parent=11 // pred_check_branch
          %195 = sbr.rel (%p193) target = $region24
        $region23: #{tpu_custom_call.1} parent=11 // pred_region
          %s197 = ssub.s32 32, 32
          %198 = vsyncadd [#allocation9], %s197
          %s200 = sshll.u32 [#allocation8], 4
          %s201 = int_to_ptr.vmem [resolvable:$true] %s200
          %203 = dma.hbm_to_vmem [thread:$0]  %s3, 32, %s201, [#allocation9]
        $region24: #{tpu_custom_call.1} parent=11 // pred_fallthru
          _
        // Predicated region
        $region25: #{tpu_custom_call.1} parent=11 // pred_check
          %p204 = pneg %p128
        $region26: #{tpu_custom_call.1} parent=11 // pred_check_branch
          %206 = sbr.rel (%p204) target = $region28
        $region27: #{tpu_custom_call.1} parent=11 // pred_region
          _
        $region28: #{tpu_custom_call.1} parent=11 // pred_fallthru
          _
      $region12: #{tpu_custom_call.1} parent=5 // pred_fallthru
        _
      %p207 = scmp.lt.s32.totalorder %s18, 2
      // Predicated region
      $region29: #{tpu_custom_call.1} parent=5 // pred_check
        %p208 = pneg %p207
      $region30: #{tpu_custom_call.1} parent=5 // pred_check_branch
        %210 = sbr.rel (%p208) target = $region32
      $region31: #{tpu_custom_call.1} parent=5 // pred_region
        // Predicated region
        $region33: #{tpu_custom_call.1} parent=31 // pred_check
          %p211 = pneg %p38
        $region34: #{tpu_custom_call.1} parent=31 // pred_check_branch
          %213 = sbr.rel (%p211) target = $region36
        $region35: #{tpu_custom_call.1} parent=31 // pred_region
          %s214 = sand.u32 %s28, 1
          %s215 = scalar_lea.sflag [#allocation4], %s214
          %s216 = sand.u32 %s28, 1
          %s217 = smul.addr %s216, 272
          %s218 = scalar_lea.vmem [#allocation3], %s217
          %s219 = smul.u32 2, %s18
          %s220 = ssub.s32 3, %s219
          %p221 = scmp.lt.s32.totalorder %s220, 2
          %s222 = scalar_select %p221, %s220, 2
          %s223 = smul.u32 128, %s222
          %s224 = smul.u32 %s223, 17
          %s226 = ssub.s32 4352, %s224
          %227 = vsyncadd %s215, %s226
          %p228 = scmp.ne.s32.totalorder 0, %s224
          %s229 = smul.addr %s219, 17
          %s230 = smul.addr %s229, 128
          %s231 = scalar_lea.hbm %s0, %s230
          %s232 = smul.u32 136, %s222
          %s233 = sshll.u32 %s218, 4
          %s234 = int_to_ptr.vmem [resolvable:$true] %s233
          %s235 = sshll.u32 %s232, 4
          %239 = dma.hbm_to_vmem [thread:$0]  (%p228), %s231, %s235, %s234, %s215, 2176, 2176, 136
        $region36: #{tpu_custom_call.1} parent=31 // pred_fallthru
          _
      $region32: #{tpu_custom_call.1} parent=5 // pred_fallthru
        _
      %p240 = scmp.le.s32.totalorder 1, %s18
      %p241 = scmp.lt.s32.totalorder %s18, 3
      %p242 = pnand %p240, %p241
      %p243 = pneg %p242
      // Predicated region
      $region37: #{tpu_custom_call.1} parent=5 // pred_check
        _
      $region38: #{tpu_custom_call.1} parent=5 // pred_check_branch
        %245 = sbr.rel (%p242) target = $region40
      $region39: #{tpu_custom_call.1} parent=5 // pred_region
        %s246 = ssub.s32 %s18, 1
        %s247 = sand.u32 %s31, 1
        %s248 = scalar_lea.sflag [#allocation4], %s247
        %s249 = sand.u32 %s31, 1
        %s250 = smul.addr %s249, 272
        %s251 = scalar_lea.vmem [#allocation3], %s250
        // Predicated region
        $region41: #{tpu_custom_call.1} parent=39 // pred_check
          %p252 = pneg %p44
        $region42: #{tpu_custom_call.1} parent=39 // pred_check_branch
          %254 = sbr.rel (%p252) target = $region44
        $region43: #{tpu_custom_call.1} parent=39 // pred_region
          %255 = dma.done %s248, 4352
        $region44: #{tpu_custom_call.1} parent=39 // pred_fallthru
          _
        // Predicated region
        $region45: #{tpu_custom_call.1} parent=39 // pred_check
          %p256 = pneg %p65
        $region46: #{tpu_custom_call.1} parent=39 // pred_check_branch
          %258 = sbr.rel (%p256) target = $region48
        $region47: #{tpu_custom_call.1} parent=39 // pred_region
          %259 = dma.done [#allocation6], 34432
        $region48: #{tpu_custom_call.1} parent=39 // pred_fallthru
          _
        // Predicated region
        $region49: #{tpu_custom_call.1} parent=39 // pred_check
          %p260 = pneg %p86
        $region50: #{tpu_custom_call.1} parent=39 // pred_check_branch
          %262 = sbr.rel (%p260) target = $region52
        $region51: #{tpu_custom_call.1} parent=39 // pred_region
          %263 = dma.done [#allocation6], 32
        $region52: #{tpu_custom_call.1} parent=39 // pred_fallthru
          _
        // Predicated region
        $region53: #{tpu_custom_call.1} parent=39 // pred_check
          %p264 = pneg %p107
        $region54: #{tpu_custom_call.1} parent=39 // pred_check_branch
          %266 = sbr.rel (%p264) target = $region56
        $region55: #{tpu_custom_call.1} parent=39 // pred_region
          %267 = dma.done [#allocation9], 32
        $region56: #{tpu_custom_call.1} parent=39 // pred_fallthru
          _
        %s268 = sand.u32 %s31, 1
        %s269 = scalar_lea.sflag [#allocation4], %s268
        %s270 = sand.u32 %s31, 1
        %s271 = smul.addr %s270, 272
        %s272 = scalar_lea.vmem [#allocation3], %s271
        %p273 = pneg %p44
        %p274 = pneg %p41
        %p275 = pneg %p65
        %p276 = pneg %p62
        %p277 = pneg %p86
        %p278 = pneg %p83
        %p279 = pneg %p107
        %p280 = pneg %p104
        %p281 = pneg %p128
        %p282 = pneg %p125
        %p283 = pneg %p154
        %p284 = pneg %p151
        %s285 = sand.u32 %s141, 1
        %s286 = sand.u32 %s141, 1
        %s287 = smul.addr %s286, 16
        %s288 = scalar_lea.vmem [#allocation10], %s287
        %s289 = smul.u32 2, %s23
        %s290 = ssub.s32 3, %s289
        %p291 = scmp.lt.s32.totalorder %s290, 2
        %s292 = scalar_select %p291, %s290, 2
        %s293 = smul.u32 128, %s292
        %s294 = smul.u32 %s293, 17
        %s295 = smul.u32 2, %s23
        %s296 = ssub.s32 3, %s295
        %p297 = scmp.lt.s32.totalorder %s296, 2
        %s298 = scalar_select %p297, %s296, 2
        %s299 = smul.u32 128, %s298
        %v301 = vld [vmem:[%s251] sm:$0xff]
        %v302 = vld [vmem:[%s251 + $0x8] sm:$0xff]
        %v303 = vld [vmem:[%s251 + $0x10] sm:$0xff]
        %v304 = vld [vmem:[%s251 + $0x18] sm:$0xff]
        %v305 = vld [vmem:[%s251 + $0x20] sm:$0xff]
        %v306 = vld [vmem:[%s251 + $0x28] sm:$0xff]
        %v307 = vld [vmem:[%s251 + $0x30] sm:$0xff]
        %v308 = vld [vmem:[%s251 + $0x38] sm:$0xff]
        %v309 = vld [vmem:[%s251 + $0x40] sm:$0xff]
        %v310 = vld [vmem:[%s251 + $0x48] sm:$0xff]
        %v311 = vld [vmem:[%s251 + $0x50] sm:$0xff]
        %v312 = vld [vmem:[%s251 + $0x58] sm:$0xff]
        %v313 = vld [vmem:[%s251 + $0x60] sm:$0xff]
        %v314 = vld [vmem:[%s251 + $0x68] sm:$0xff]
        %v315 = vld [vmem:[%s251 + $0x70] sm:$0xff]
        %v316 = vld [vmem:[%s251 + $0x78] sm:$0xff]
        %v317 = vld [vmem:[%s251 + $0x80] sm:$0xff]
        %v318 = vld [vmem:[%s251 + $0x88] sm:$0xff]
        %v319 = vld [vmem:[%s251 + $0x90] sm:$0xff]
        %v320 = vld [vmem:[%s251 + $0x98] sm:$0xff]
        %v321 = vld [vmem:[%s251 + $0xa0] sm:$0xff]
        %v322 = vld [vmem:[%s251 + $0xa8] sm:$0xff]
        %v323 = vld [vmem:[%s251 + $0xb0] sm:$0xff]
        %v324 = vld [vmem:[%s251 + $0xb8] sm:$0xff]
        %v325 = vld [vmem:[%s251 + $0xc0] sm:$0xff]
        %v326 = vld [vmem:[%s251 + $0xc8] sm:$0xff]
        %v327 = vld [vmem:[%s251 + $0xd0] sm:$0xff]
        %v328 = vld [vmem:[%s251 + $0xd8] sm:$0xff]
        %v329 = vld [vmem:[%s251 + $0xe0] sm:$0xff]
        %v330 = vld [vmem:[%s251 + $0xe8] sm:$0xff]
        %v331 = vld [vmem:[%s251 + $0xf0] sm:$0xff]
        %v332 = vld [vmem:[%s251 + $0xf8] sm:$0xff]
        %v333 = vld [vmem:[%s251 + $0x100] sm:$0xff]
        %v334 = vld [vmem:[%s251 + $0x108] sm:$0xff]
        %v335 = vpack.c.bf16 %v318, %v301
        %v336 = vpack.c.bf16 %v319, %v302
        %v337 = vpack.c.bf16 %v320, %v303
        %v338 = vpack.c.bf16 %v321, %v304
        %v339 = vpack.c.bf16 %v322, %v305
        %v340 = vpack.c.bf16 %v323, %v306
        %v341 = vpack.c.bf16 %v324, %v307
        %v342 = vpack.c.bf16 %v325, %v308
        %v343 = vpack.c.bf16 %v326, %v309
        %v344 = vpack.c.bf16 %v327, %v310
        %v345 = vpack.c.bf16 %v328, %v311
        %v346 = vpack.c.bf16 %v329, %v312
        %v347 = vpack.c.bf16 %v330, %v313
        %v348 = vpack.c.bf16 %v331, %v314
        %v349 = vpack.c.bf16 %v332, %v315
        %v350 = vpack.c.bf16 %v333, %v316
        %v351 = vpack.c.bf16 %v334, %v317
        %v352 = vld [vmem:[#allocation5] sm:$0xff]
        %v353 = vld [vmem:[#allocation5 + $0x8] sm:$0xff]
        %v354 = vld [vmem:[#allocation5 + $0x10] sm:$0xff]
        %v355 = vld [vmem:[#allocation5 + $0x18] sm:$0xff]
        %v356 = vld [vmem:[#allocation5 + $0x20] sm:$0xff]
        %v357 = vld [vmem:[#allocation5 + $0x28] sm:$0xff]
        %v358 = vld [vmem:[#allocation5 + $0x30] sm:$0xff]
        %v359 = vld [vmem:[#allocation5 + $0x38] sm:$0xff]
        %v360 = vld [vmem:[#allocation5 + $0x40] sm:$0xff]
        %v361 = vld [vmem:[#allocation5 + $0x48] sm:$0xff]
        %v362 = vld [vmem:[#allocation5 + $0x50] sm:$0xff]
        %v363 = vld [vmem:[#allocation5 + $0x58] sm:$0xff]
        %v364 = vld [vmem:[#allocation5 + $0x60] sm:$0xff]
        %v365 = vld [vmem:[#allocation5 + $0x68] sm:$0xff]
        %v366 = vld [vmem:[#allocation5 + $0x70] sm:$0xff]
        %v367 = vld [vmem:[#allocation5 + $0x78] sm:$0xff]
        %v368 = vld [vmem:[#allocation5 + $0x80] sm:$0xff]
        %v369 = vld [vmem:[#allocation5 + $0x88] sm:$0xff]
        %v370 = vld [vmem:[#allocation5 + $0x90] sm:$0xff]
        %v371 = vld [vmem:[#allocation5 + $0x98] sm:$0xff]
        %v372 = vld [vmem:[#allocation5 + $0xa0] sm:$0xff]
        %v373 = vld [vmem:[#allocation5 + $0xa8] sm:$0xff]
        %v374 = vld [vmem:[#allocation5 + $0xb0] sm:$0xff]
        %v375 = vld [vmem:[#allocation5 + $0xb8] sm:$0xff]
        %v376 = vld [vmem:[#allocation5 + $0xc0] sm:$0xff]
        %v377 = vld [vmem:[#allocation5 + $0xc8] sm:$0xff]
        %v378 = vld [vmem:[#allocation5 + $0xd0] sm:$0xff]
        %v379 = vld [vmem:[#allocation5 + $0xd8] sm:$0xff]
        %v380 = vld [vmem:[#allocation5 + $0xe0] sm:$0xff]
        %v381 = vld [vmem:[#allocation5 + $0xe8] sm:$0xff]
        %v382 = vld [vmem:[#allocation5 + $0xf0] sm:$0xff]
        %v383 = vld [vmem:[#allocation5 + $0xf8] sm:$0xff]
        %v384 = vld [vmem:[#allocation5 + $0x100] sm:$0xff]
        %v385 = vld [vmem:[#allocation5 + $0x108] sm:$0xff]
        %v386 = vld [vmem:[#allocation5 + $0x110] sm:$0xff]
        %v387 = vld [vmem:[#allocation5 + $0x118] sm:$0xff]
        %v388 = vld [vmem:[#allocation5 + $0x120] sm:$0xff]
        %v389 = vld [vmem:[#allocation5 + $0x128] sm:$0xff]
        %v390 = vld [vmem:[#allocation5 + $0x130] sm:$0xff]
        %v391 = vld [vmem:[#allocation5 + $0x138] sm:$0xff]
        %v392 = vld [vmem:[#allocation5 + $0x140] sm:$0xff]
        %v393 = vld [vmem:[#allocation5 + $0x148] sm:$0xff]
        %v394 = vld [vmem:[#allocation5 + $0x150] sm:$0xff]
        %v395 = vld [vmem:[#allocation5 + $0x158] sm:$0xff]
        %v396 = vld [vmem:[#allocation5 + $0x160] sm:$0xff]
        %v397 = vld [vmem:[#allocation5 + $0x168] sm:$0xff]
        %v398 = vld [vmem:[#allocation5 + $0x170] sm:$0xff]
        %v399 = vld [vmem:[#allocation5 + $0x178] sm:$0xff]
        %v400 = vld [vmem:[#allocation5 + $0x180] sm:$0xff]
        %v401 = vld [vmem:[#allocation5 + $0x188] sm:$0xff]
        %v402 = vld [vmem:[#allocation5 + $0x190] sm:$0xff]
        %v403 = vld [vmem:[#allocation5 + $0x198] sm:$0xff]
        %v404 = vld [vmem:[#allocation5 + $0x1a0] sm:$0xff]
        %v405 = vld [vmem:[#allocation5 + $0x1a8] sm:$0xff]
        %v406 = vld [vmem:[#allocation5 + $0x1b0] sm:$0xff]
        %v407 = vld [vmem:[#allocation5 + $0x1b8] sm:$0xff]
        %v408 = vld [vmem:[#allocation5 + $0x1c0] sm:$0xff]
        %v409 = vld [vmem:[#allocation5 + $0x1c8] sm:$0xff]
        %v410 = vld [vmem:[#allocation5 + $0x1d0] sm:$0xff]
        %v411 = vld [vmem:[#allocation5 + $0x1d8] sm:$0xff]
        %v412 = vld [vmem:[#allocation5 + $0x1e0] sm:$0xff]
        %v413 = vld [vmem:[#allocation5 + $0x1e8] sm:$0xff]
        %v414 = vld [vmem:[#allocation5 + $0x1f0] sm:$0xff]
        %v415 = vld [vmem:[#allocation5 + $0x1f8] sm:$0xff]
        %v416 = vld [vmem:[#allocation5 + $0x200] sm:$0xff]
        %v417 = vld [vmem:[#allocation5 + $0x208] sm:$0xff]
        %v418 = vld [vmem:[#allocation5 + $0x210] sm:$0xff]
        %v419 = vld [vmem:[#allocation5 + $0x218] sm:$0xff]
        %v420 = vld [vmem:[#allocation5 + $0x220] sm:$0xff]
        %v421 = vld [vmem:[#allocation5 + $0x228] sm:$0xff]
        %v422 = vld [vmem:[#allocation5 + $0x230] sm:$0xff]
        %v423 = vld [vmem:[#allocation5 + $0x238] sm:$0xff]
        %v424 = vld [vmem:[#allocation5 + $0x240] sm:$0xff]
        %v425 = vld [vmem:[#allocation5 + $0x248] sm:$0xff]
        %v426 = vld [vmem:[#allocation5 + $0x250] sm:$0xff]
        %v427 = vld [vmem:[#allocation5 + $0x258] sm:$0xff]
        %v428 = vld [vmem:[#allocation5 + $0x260] sm:$0xff]
        %v429 = vld [vmem:[#allocation5 + $0x268] sm:$0xff]
        %v430 = vld [vmem:[#allocation5 + $0x270] sm:$0xff]
        %v431 = vld [vmem:[#allocation5 + $0x278] sm:$0xff]
        %v432 = vld [vmem:[#allocation5 + $0x280] sm:$0xff]
        %v433 = vld [vmem:[#allocation5 + $0x288] sm:$0xff]
        %v434 = vld [vmem:[#allocation5 + $0x290] sm:$0xff]
        %v435 = vld [vmem:[#allocation5 + $0x298] sm:$0xff]
        %v436 = vld [vmem:[#allocation5 + $0x2a0] sm:$0xff]
        %v437 = vld [vmem:[#allocation5 + $0x2a8] sm:$0xff]
        %v438 = vld [vmem:[#allocation5 + $0x2b0] sm:$0xff]
        %v439 = vld [vmem:[#allocation5 + $0x2b8] sm:$0xff]
        %v440 = vld [vmem:[#allocation5 + $0x2c0] sm:$0xff]
        %v441 = vld [vmem:[#allocation5 + $0x2c8] sm:$0xff]
        %v442 = vld [vmem:[#allocation5 + $0x2d0] sm:$0xff]
        %v443 = vld [vmem:[#allocation5 + $0x2d8] sm:$0xff]
        %v444 = vld [vmem:[#allocation5 + $0x2e0] sm:$0xff]
        %v445 = vld [vmem:[#allocation5 + $0x2e8] sm:$0xff]
        %v446 = vld [vmem:[#allocation5 + $0x2f0] sm:$0xff]
        %v447 = vld [vmem:[#allocation5 + $0x2f8] sm:$0xff]
        %v448 = vld [vmem:[#allocation5 + $0x300] sm:$0xff]
        %v449 = vld [vmem:[#allocation5 + $0x308] sm:$0xff]
        %v450 = vld [vmem:[#allocation5 + $0x310] sm:$0xff]
        %v451 = vld [vmem:[#allocation5 + $0x318] sm:$0xff]
        %v452 = vld [vmem:[#allocation5 + $0x320] sm:$0xff]
        %v453 = vld [vmem:[#allocation5 + $0x328] sm:$0xff]
        %v454 = vld [vmem:[#allocation5 + $0x330] sm:$0xff]
        %v455 = vld [vmem:[#allocation5 + $0x338] sm:$0xff]
        %v456 = vld [vmem:[#allocation5 + $0x340] sm:$0xff]
        %v457 = vld [vmem:[#allocation5 + $0x348] sm:$0xff]
        %v458 = vld [vmem:[#allocation5 + $0x350] sm:$0xff]
        %v459 = vld [vmem:[#allocation5 + $0x358] sm:$0xff]
        %v460 = vld [vmem:[#allocation5 + $0x360] sm:$0xff]
        %v461 = vld [vmem:[#allocation5 + $0x368] sm:$0xff]
        %v462 = vld [vmem:[#allocation5 + $0x370] sm:$0xff]
        %v463 = vld [vmem:[#allocation5 + $0x378] sm:$0xff]
        %v464 = vld [vmem:[#allocation5 + $0x380] sm:$0xff]
        %v465 = vld [vmem:[#allocation5 + $0x388] sm:$0xff]
        %v466 = vld [vmem:[#allocation5 + $0x390] sm:$0xff]
        %v467 = vld [vmem:[#allocation5 + $0x398] sm:$0xff]
        %v468 = vld [vmem:[#allocation5 + $0x3a0] sm:$0xff]
        %v469 = vld [vmem:[#allocation5 + $0x3a8] sm:$0xff]
        %v470 = vld [vmem:[#allocation5 + $0x3b0] sm:$0xff]
        %v471 = vld [vmem:[#allocation5 + $0x3b8] sm:$0xff]
        %v472 = vld [vmem:[#allocation5 + $0x3c0] sm:$0xff]
        %v473 = vld [vmem:[#allocation5 + $0x3c8] sm:$0xff]
        %v474 = vld [vmem:[#allocation5 + $0x3d0] sm:$0xff]
        %v475 = vld [vmem:[#allocation5 + $0x3d8] sm:$0xff]
        %v476 = vld [vmem:[#allocation5 + $0x3e0] sm:$0xff]
        %v477 = vld [vmem:[#allocation5 + $0x3e8] sm:$0xff]
        %v478 = vld [vmem:[#allocation5 + $0x3f0] sm:$0xff]
        %v479 = vld [vmem:[#allocation5 + $0x3f8] sm:$0xff]
        %v480 = vld [vmem:[#allocation5 + $0x400] sm:$0xff]
        %v481 = vld [vmem:[#allocation5 + $0x408] sm:$0xff]
        %v482 = vld [vmem:[#allocation5 + $0x410] sm:$0xff]
        %v483 = vld [vmem:[#allocation5 + $0x418] sm:$0xff]
        %v484 = vld [vmem:[#allocation5 + $0x420] sm:$0xff]
        %v485 = vld [vmem:[#allocation5 + $0x428] sm:$0xff]
        %v486 = vld [vmem:[#allocation5 + $0x430] sm:$0xff]
        %v487 = vld [vmem:[#allocation5 + $0x438] sm:$0xff]
        %v488 = vld [vmem:[#allocation5 + $0x440] sm:$0xff]
        %v489 = vld [vmem:[#allocation5 + $0x448] sm:$0xff]
        %v490 = vld [vmem:[#allocation5 + $0x450] sm:$0xff]
        %v491 = vld [vmem:[#allocation5 + $0x458] sm:$0xff]
        %v492 = vld [vmem:[#allocation5 + $0x460] sm:$0xff]
        %v493 = vld [vmem:[#allocation5 + $0x468] sm:$0xff]
        %v494 = vld [vmem:[#allocation5 + $0x470] sm:$0xff]
        %v495 = vld [vmem:[#allocation5 + $0x478] sm:$0xff]
        %v496 = vld [vmem:[#allocation5 + $0x480] sm:$0xff]
        %v497 = vld [vmem:[#allocation5 + $0x488] sm:$0xff]
        %v498 = vld [vmem:[#allocation5 + $0x490] sm:$0xff]
        %v499 = vld [vmem:[#allocation5 + $0x498] sm:$0xff]
        %v500 = vld [vmem:[#allocation5 + $0x4a0] sm:$0xff]
        %v501 = vld [vmem:[#allocation5 + $0x4a8] sm:$0xff]
        %v502 = vld [vmem:[#allocation5 + $0x4b0] sm:$0xff]
        %v503 = vld [vmem:[#allocation5 + $0x4b8] sm:$0xff]
        %v504 = vld [vmem:[#allocation5 + $0x4c0] sm:$0xff]
        %v505 = vld [vmem:[#allocation5 + $0x4c8] sm:$0xff]
        %v506 = vld [vmem:[#allocation5 + $0x4d0] sm:$0xff]
        %v507 = vld [vmem:[#allocation5 + $0x4d8] sm:$0xff]
        %v508 = vld [vmem:[#allocation5 + $0x4e0] sm:$0xff]
        %v509 = vld [vmem:[#allocation5 + $0x4e8] sm:$0xff]
        %v510 = vld [vmem:[#allocation5 + $0x4f0] sm:$0xff]
        %v511 = vld [vmem:[#allocation5 + $0x4f8] sm:$0xff]
        %v512 = vld [vmem:[#allocation5 + $0x500] sm:$0xff]
        %v513 = vld [vmem:[#allocation5 + $0x508] sm:$0xff]
        %v514 = vld [vmem:[#allocation5 + $0x510] sm:$0xff]
        %v515 = vld [vmem:[#allocation5 + $0x518] sm:$0xff]
        %v516 = vld [vmem:[#allocation5 + $0x520] sm:$0xff]
        %v517 = vld [vmem:[#allocation5 + $0x528] sm:$0xff]
        %v518 = vld [vmem:[#allocation5 + $0x530] sm:$0xff]
        %v519 = vld [vmem:[#allocation5 + $0x538] sm:$0xff]
        %v520 = vld [vmem:[#allocation5 + $0x540] sm:$0xff]
        %v521 = vld [vmem:[#allocation5 + $0x548] sm:$0xff]
        %v522 = vld [vmem:[#allocation5 + $0x550] sm:$0xff]
        %v523 = vld [vmem:[#allocation5 + $0x558] sm:$0xff]
        %v524 = vld [vmem:[#allocation5 + $0x560] sm:$0xff]
        %v525 = vld [vmem:[#allocation5 + $0x568] sm:$0xff]
        %v526 = vld [vmem:[#allocation5 + $0x570] sm:$0xff]
        %v527 = vld [vmem:[#allocation5 + $0x578] sm:$0xff]
        %v528 = vld [vmem:[#allocation5 + $0x580] sm:$0xff]
        %v529 = vld [vmem:[#allocation5 + $0x588] sm:$0xff]
        %v530 = vld [vmem:[#allocation5 + $0x590] sm:$0xff]
        %v531 = vld [vmem:[#allocation5 + $0x598] sm:$0xff]
        %v532 = vld [vmem:[#allocation5 + $0x5a0] sm:$0xff]
        %v533 = vld [vmem:[#allocation5 + $0x5a8] sm:$0xff]
        %v534 = vld [vmem:[#allocation5 + $0x5b0] sm:$0xff]
        %v535 = vld [vmem:[#allocation5 + $0x5b8] sm:$0xff]
        %v536 = vld [vmem:[#allocation5 + $0x5c0] sm:$0xff]
        %v537 = vld [vmem:[#allocation5 + $0x5c8] sm:$0xff]
        %v538 = vld [vmem:[#allocation5 + $0x5d0] sm:$0xff]
        %v539 = vld [vmem:[#allocation5 + $0x5d8] sm:$0xff]
        %v540 = vld [vmem:[#allocation5 + $0x5e0] sm:$0xff]
        %v541 = vld [vmem:[#allocation5 + $0x5e8] sm:$0xff]
        %v542 = vld [vmem:[#allocation5 + $0x5f0] sm:$0xff]
        %v543 = vld [vmem:[#allocation5 + $0x5f8] sm:$0xff]
        %v544 = vld [vmem:[#allocation5 + $0x600] sm:$0xff]
        %v545 = vld [vmem:[#allocation5 + $0x608] sm:$0xff]
        %v546 = vld [vmem:[#allocation5 + $0x610] sm:$0xff]
        %v547 = vld [vmem:[#allocation5 + $0x618] sm:$0xff]
        %v548 = vld [vmem:[#allocation5 + $0x620] sm:$0xff]
        %v549 = vld [vmem:[#allocation5 + $0x628] sm:$0xff]
        %v550 = vld [vmem:[#allocation5 + $0x630] sm:$0xff]
        %v551 = vld [vmem:[#allocation5 + $0x638] sm:$0xff]
        %v552 = vld [vmem:[#allocation5 + $0x640] sm:$0xff]
        %v553 = vld [vmem:[#allocation5 + $0x648] sm:$0xff]
        %v554 = vld [vmem:[#allocation5 + $0x650] sm:$0xff]
        %v555 = vld [vmem:[#allocation5 + $0x658] sm:$0xff]
        %v556 = vld [vmem:[#allocation5 + $0x660] sm:$0xff]
        %v557 = vld [vmem:[#allocation5 + $0x668] sm:$0xff]
        %v558 = vld [vmem:[#allocation5 + $0x670] sm:$0xff]
        %v559 = vld [vmem:[#allocation5 + $0x678] sm:$0xff]
        %v560 = vld [vmem:[#allocation5 + $0x680] sm:$0xff]
        %v561 = vld [vmem:[#allocation5 + $0x688] sm:$0xff]
        %v562 = vld [vmem:[#allocation5 + $0x690] sm:$0xff]
        %v563 = vld [vmem:[#allocation5 + $0x698] sm:$0xff]
        %v564 = vld [vmem:[#allocation5 + $0x6a0] sm:$0xff]
        %v565 = vld [vmem:[#allocation5 + $0x6a8] sm:$0xff]
        %v566 = vld [vmem:[#allocation5 + $0x6b0] sm:$0xff]
        %v567 = vld [vmem:[#allocation5 + $0x6b8] sm:$0xff]
        %v568 = vld [vmem:[#allocation5 + $0x6c0] sm:$0xff]
        %v569 = vld [vmem:[#allocation5 + $0x6c8] sm:$0xff]
        %v570 = vld [vmem:[#allocation5 + $0x6d0] sm:$0xff]
        %v571 = vld [vmem:[#allocation5 + $0x6d8] sm:$0xff]
        %v572 = vld [vmem:[#allocation5 + $0x6e0] sm:$0xff]
        %v573 = vld [vmem:[#allocation5 + $0x6e8] sm:$0xff]
        %v574 = vld [vmem:[#allocation5 + $0x6f0] sm:$0xff]
        %v575 = vld [vmem:[#allocation5 + $0x6f8] sm:$0xff]
        %v576 = vld [vmem:[#allocation5 + $0x700] sm:$0xff]
        %v577 = vld [vmem:[#allocation5 + $0x708] sm:$0xff]
        %v578 = vld [vmem:[#allocation5 + $0x710] sm:$0xff]
        %v579 = vld [vmem:[#allocation5 + $0x718] sm:$0xff]
        %v580 = vld [vmem:[#allocation5 + $0x720] sm:$0xff]
        %v581 = vld [vmem:[#allocation5 + $0x728] sm:$0xff]
        %v582 = vld [vmem:[#allocation5 + $0x730] sm:$0xff]
        %v583 = vld [vmem:[#allocation5 + $0x738] sm:$0xff]
        %v584 = vld [vmem:[#allocation5 + $0x740] sm:$0xff]
        %v585 = vld [vmem:[#allocation5 + $0x748] sm:$0xff]
        %v586 = vld [vmem:[#allocation5 + $0x750] sm:$0xff]
        %v587 = vld [vmem:[#allocation5 + $0x758] sm:$0xff]
        %v588 = vld [vmem:[#allocation5 + $0x760] sm:$0xff]
        %v589 = vld [vmem:[#allocation5 + $0x768] sm:$0xff]
        %v590 = vld [vmem:[#allocation5 + $0x770] sm:$0xff]
        %v591 = vld [vmem:[#allocation5 + $0x778] sm:$0xff]
        %v592 = vld [vmem:[#allocation5 + $0x780] sm:$0xff]
        %v593 = vld [vmem:[#allocation5 + $0x788] sm:$0xff]
        %v594 = vld [vmem:[#allocation5 + $0x790] sm:$0xff]
        %v595 = vld [vmem:[#allocation5 + $0x798] sm:$0xff]
        %v596 = vld [vmem:[#allocation5 + $0x7a0] sm:$0xff]
        %v597 = vld [vmem:[#allocation5 + $0x7a8] sm:$0xff]
        %v598 = vld [vmem:[#allocation5 + $0x7b0] sm:$0xff]
        %v599 = vld [vmem:[#allocation5 + $0x7b8] sm:$0xff]
        %v600 = vld [vmem:[#allocation5 + $0x7c0] sm:$0xff]
        %v601 = vld [vmem:[#allocation5 + $0x7c8] sm:$0xff]
        %v602 = vld [vmem:[#allocation5 + $0x7d0] sm:$0xff]
        %v603 = vld [vmem:[#allocation5 + $0x7d8] sm:$0xff]
        %v604 = vld [vmem:[#allocation5 + $0x7e0] sm:$0xff]
        %v605 = vld [vmem:[#allocation5 + $0x7e8] sm:$0xff]
        %v606 = vld [vmem:[#allocation5 + $0x7f0] sm:$0xff]
        %v607 = vld [vmem:[#allocation5 + $0x7f8] sm:$0xff]
        %v608 = vld [vmem:[#allocation5 + $0x800] sm:$0xff]
        %v609 = vld [vmem:[#allocation5 + $0x808] sm:$0xff]
        %v610 = vld [vmem:[#allocation5 + $0x810] sm:$0xff]
        %v611 = vld [vmem:[#allocation5 + $0x818] sm:$0xff]
        %v612 = vld [vmem:[#allocation5 + $0x820] sm:$0xff]
        %v613 = vld [vmem:[#allocation5 + $0x828] sm:$0xff]
        %v614 = vld [vmem:[#allocation5 + $0x830] sm:$0xff]
        %v615 = vld [vmem:[#allocation5 + $0x838] sm:$0xff]
        %v616 = vld [vmem:[#allocation5 + $0x840] sm:$0xff]
        %v617 = vld [vmem:[#allocation5 + $0x848] sm:$0xff]
        %v618 = vld [vmem:[#allocation5 + $0x850] sm:$0xff]
        %v619 = vld [vmem:[#allocation5 + $0x858] sm:$0xff]
        %v620 = vld [vmem:[#allocation5 + $0x860] sm:$0xff]
        %v621 = vld [vmem:[#allocation7] sm:$0x3]
        %v623 = vlaneseq
        %v624 = vshrl.u32 %v623, 7
        %v625 = vsub.s32 0, %v624
        %v626 = vrot.slane %v621, %v625
        %v627 = vlaneseq
        %v628 = vshrl.u32 %v627, 7
        %v629 = vsub.s32 1, %v628
        %v630 = vrot.slane %v621, %v629
        %v902 = vunpack.c.l.b16 %v352
        %v903 = vunpack.c.h.b16 %v352
        %v904 = vunpack.c.l.b16 %v353
        %v905 = vunpack.c.h.b16 %v353
        %v906 = vunpack.c.l.b16 %v354
        %v907 = vunpack.c.h.b16 %v354
        %v908 = vunpack.c.l.b16 %v355
        %v909 = vunpack.c.h.b16 %v355
        %v910 = vunpack.c.l.b16 %v356
        %v911 = vunpack.c.h.b16 %v356
        %v912 = vunpack.c.l.b16 %v357
        %v913 = vunpack.c.h.b16 %v357
        %v914 = vunpack.c.l.b16 %v358
        %v915 = vunpack.c.h.b16 %v358
        %v916 = vunpack.c.l.b16 %v359
        %v917 = vunpack.c.h.b16 %v359
        %v918 = vunpack.c.l.b16 %v360
        %v919 = vunpack.c.h.b16 %v360
        %v920 = vunpack.c.l.b16 %v361
        %v921 = vunpack.c.h.b16 %v361
        %v922 = vunpack.c.l.b16 %v362
        %v923 = vunpack.c.h.b16 %v362
        %v924 = vunpack.c.l.b16 %v363
        %v925 = vunpack.c.h.b16 %v363
        %v926 = vunpack.c.l.b16 %v364
        %v927 = vunpack.c.h.b16 %v364
        %v928 = vunpack.c.l.b16 %v365
        %v929 = vunpack.c.h.b16 %v365
        %v930 = vunpack.c.l.b16 %v366
        %v931 = vunpack.c.h.b16 %v366
        %v932 = vunpack.c.l.b16 %v367
        %v933 = vunpack.c.h.b16 %v367
        %v934 = vunpack.c.l.b16 %v368
        %v935 = vunpack.c.h.b16 %v368
        %v936 = vunpack.c.l.b16 %v369
        %v937 = vunpack.c.h.b16 %v369
        %v938 = vunpack.c.l.b16 %v370
        %v939 = vunpack.c.h.b16 %v370
        %v940 = vunpack.c.l.b16 %v371
        %v941 = vunpack.c.h.b16 %v371
        %v942 = vunpack.c.l.b16 %v372
        %v943 = vunpack.c.h.b16 %v372
        %v944 = vunpack.c.l.b16 %v373
        %v945 = vunpack.c.h.b16 %v373
        %v946 = vunpack.c.l.b16 %v374
        %v947 = vunpack.c.h.b16 %v374
        %v948 = vunpack.c.l.b16 %v375
        %v949 = vunpack.c.h.b16 %v375
        %v950 = vunpack.c.l.b16 %v376
        %v951 = vunpack.c.h.b16 %v376
        %v952 = vunpack.c.l.b16 %v377
        %v953 = vunpack.c.h.b16 %v377
        %v954 = vunpack.c.l.b16 %v378
        %v955 = vunpack.c.h.b16 %v378
        %v956 = vunpack.c.l.b16 %v379
        %v957 = vunpack.c.h.b16 %v379
        %v958 = vunpack.c.l.b16 %v380
        %v959 = vunpack.c.h.b16 %v380
        %v960 = vunpack.c.l.b16 %v381
        %v961 = vunpack.c.h.b16 %v381
        %v962 = vunpack.c.l.b16 %v382
        %v963 = vunpack.c.h.b16 %v382
        %v964 = vunpack.c.l.b16 %v383
        %v965 = vunpack.c.h.b16 %v383
        %v966 = vunpack.c.l.b16 %v384
        %v967 = vunpack.c.h.b16 %v384
        %v968 = vunpack.c.l.b16 %v385
        %v969 = vunpack.c.h.b16 %v385
        %v970 = vunpack.c.l.b16 %v386
        %v971 = vunpack.c.h.b16 %v386
        %v972 = vunpack.c.l.b16 %v387
        %v973 = vunpack.c.h.b16 %v387
        %v974 = vunpack.c.l.b16 %v388
        %v975 = vunpack.c.h.b16 %v388
        %v976 = vunpack.c.l.b16 %v389
        %v977 = vunpack.c.h.b16 %v389
        %v978 = vunpack.c.l.b16 %v390
        %v979 = vunpack.c.h.b16 %v390
        %v980 = vunpack.c.l.b16 %v391
        %v981 = vunpack.c.h.b16 %v391
        %v982 = vunpack.c.l.b16 %v392
        %v983 = vunpack.c.h.b16 %v392
        %v984 = vunpack.c.l.b16 %v393
        %v985 = vunpack.c.h.b16 %v393
        %v986 = vunpack.c.l.b16 %v394
        %v987 = vunpack.c.h.b16 %v394
        %v988 = vunpack.c.l.b16 %v395
        %v989 = vunpack.c.h.b16 %v395
        %v990 = vunpack.c.l.b16 %v396
        %v991 = vunpack.c.h.b16 %v396
        %v992 = vunpack.c.l.b16 %v397
        %v993 = vunpack.c.h.b16 %v397
        %v994 = vunpack.c.l.b16 %v398
        %v995 = vunpack.c.h.b16 %v398
        %v996 = vunpack.c.l.b16 %v399
        %v997 = vunpack.c.h.b16 %v399
        %v998 = vunpack.c.l.b16 %v400
        %v999 = vunpack.c.h.b16 %v400
        %v1000 = vunpack.c.l.b16 %v401
        %v1001 = vunpack.c.h.b16 %v401
        %v1002 = vunpack.c.l.b16 %v402
        %v1003 = vunpack.c.h.b16 %v402
        %v1004 = vunpack.c.l.b16 %v403
        %v1005 = vunpack.c.h.b16 %v403
        %v1006 = vunpack.c.l.b16 %v404
        %v1007 = vunpack.c.h.b16 %v404
        %v1008 = vunpack.c.l.b16 %v405
        %v1009 = vunpack.c.h.b16 %v405
        %v1010 = vunpack.c.l.b16 %v406
        %v1011 = vunpack.c.h.b16 %v406
        %v1012 = vunpack.c.l.b16 %v407
        %v1013 = vunpack.c.h.b16 %v407
        %v1014 = vunpack.c.l.b16 %v408
        %v1015 = vunpack.c.h.b16 %v408
        %v1016 = vunpack.c.l.b16 %v409
        %v1017 = vunpack.c.h.b16 %v409
        %v1018 = vunpack.c.l.b16 %v410
        %v1019 = vunpack.c.h.b16 %v410
        %v1020 = vunpack.c.l.b16 %v411
        %v1021 = vunpack.c.h.b16 %v411
        %v1022 = vunpack.c.l.b16 %v412
        %v1023 = vunpack.c.h.b16 %v412
        %v1024 = vunpack.c.l.b16 %v413
        %v1025 = vunpack.c.h.b16 %v413
        %v1026 = vunpack.c.l.b16 %v414
        %v1027 = vunpack.c.h.b16 %v414
        %v1028 = vunpack.c.l.b16 %v415
        %v1029 = vunpack.c.h.b16 %v415
        %v1030 = vunpack.c.l.b16 %v416
        %v1031 = vunpack.c.h.b16 %v416
        %v1032 = vunpack.c.l.b16 %v417
        %v1033 = vunpack.c.h.b16 %v417
        %v1034 = vunpack.c.l.b16 %v418
        %v1035 = vunpack.c.h.b16 %v418
        %v1036 = vunpack.c.l.b16 %v419
        %v1037 = vunpack.c.h.b16 %v419
        %v1038 = vunpack.c.l.b16 %v420
        %v1039 = vunpack.c.h.b16 %v420
        %v1040 = vunpack.c.l.b16 %v421
        %v1041 = vunpack.c.h.b16 %v421
        %v1042 = vunpack.c.l.b16 %v422
        %v1043 = vunpack.c.h.b16 %v422
        %v1044 = vunpack.c.l.b16 %v423
        %v1045 = vunpack.c.h.b16 %v423
        %v1046 = vunpack.c.l.b16 %v424
        %v1047 = vunpack.c.h.b16 %v424
        %v1048 = vunpack.c.l.b16 %v425
        %v1049 = vunpack.c.h.b16 %v425
        %v1050 = vunpack.c.l.b16 %v426
        %v1051 = vunpack.c.h.b16 %v426
        %v1052 = vunpack.c.l.b16 %v427
        %v1053 = vunpack.c.h.b16 %v427
        %v1054 = vunpack.c.l.b16 %v428
        %v1055 = vunpack.c.h.b16 %v428
        %v1056 = vunpack.c.l.b16 %v429
        %v1057 = vunpack.c.h.b16 %v429
        %v1058 = vunpack.c.l.b16 %v430
        %v1059 = vunpack.c.h.b16 %v430
        %v1060 = vunpack.c.l.b16 %v431
        %v1061 = vunpack.c.h.b16 %v431
        %v1062 = vunpack.c.l.b16 %v432
        %v1063 = vunpack.c.h.b16 %v432
        %v1064 = vunpack.c.l.b16 %v433
        %v1065 = vunpack.c.h.b16 %v433
        %v1066 = vunpack.c.l.b16 %v434
        %v1067 = vunpack.c.h.b16 %v434
        %v1068 = vunpack.c.l.b16 %v435
        %v1069 = vunpack.c.h.b16 %v435
        %v1070 = vunpack.c.l.b16 %v436
        %v1071 = vunpack.c.h.b16 %v436
        %v1072 = vunpack.c.l.b16 %v437
        %v1073 = vunpack.c.h.b16 %v437
        %v1074 = vunpack.c.l.b16 %v438
        %v1075 = vunpack.c.h.b16 %v438
        %v1076 = vunpack.c.l.b16 %v439
        %v1077 = vunpack.c.h.b16 %v439
        %v1078 = vunpack.c.l.b16 %v440
        %v1079 = vunpack.c.h.b16 %v440
        %v1080 = vunpack.c.l.b16 %v441
        %v1081 = vunpack.c.h.b16 %v441
        %v1082 = vunpack.c.l.b16 %v442
        %v1083 = vunpack.c.h.b16 %v442
        %v1084 = vunpack.c.l.b16 %v443
        %v1085 = vunpack.c.h.b16 %v443
        %v1086 = vunpack.c.l.b16 %v444
        %v1087 = vunpack.c.h.b16 %v444
        %v1088 = vunpack.c.l.b16 %v445
        %v1089 = vunpack.c.h.b16 %v445
        %v1090 = vunpack.c.l.b16 %v446
        %v1091 = vunpack.c.h.b16 %v446
        %v1092 = vunpack.c.l.b16 %v447
        %v1093 = vunpack.c.h.b16 %v447
        %v1094 = vunpack.c.l.b16 %v448
        %v1095 = vunpack.c.h.b16 %v448
        %v1096 = vunpack.c.l.b16 %v449
        %v1097 = vunpack.c.h.b16 %v449
        %v1098 = vunpack.c.l.b16 %v450
        %v1099 = vunpack.c.h.b16 %v450
        %v1100 = vunpack.c.l.b16 %v451
        %v1101 = vunpack.c.h.b16 %v451
        %v1102 = vunpack.c.l.b16 %v452
        %v1103 = vunpack.c.h.b16 %v452
        %v1104 = vunpack.c.l.b16 %v453
        %v1105 = vunpack.c.h.b16 %v453
        %v1106 = vunpack.c.l.b16 %v454
        %v1107 = vunpack.c.h.b16 %v454
        %v1108 = vunpack.c.l.b16 %v455
        %v1109 = vunpack.c.h.b16 %v455
        %v1110 = vunpack.c.l.b16 %v456
        %v1111 = vunpack.c.h.b16 %v456
        %v1112 = vunpack.c.l.b16 %v457
        %v1113 = vunpack.c.h.b16 %v457
        %v1114 = vunpack.c.l.b16 %v458
        %v1115 = vunpack.c.h.b16 %v458
        %v1116 = vunpack.c.l.b16 %v459
        %v1117 = vunpack.c.h.b16 %v459
        %v1118 = vunpack.c.l.b16 %v460
        %v1119 = vunpack.c.h.b16 %v460
        %v1120 = vunpack.c.l.b16 %v461
        %v1121 = vunpack.c.h.b16 %v461
        %v1122 = vunpack.c.l.b16 %v462
        %v1123 = vunpack.c.h.b16 %v462
        %v1124 = vunpack.c.l.b16 %v463
        %v1125 = vunpack.c.h.b16 %v463
        %v1126 = vunpack.c.l.b16 %v464
        %v1127 = vunpack.c.h.b16 %v464
        %v1128 = vunpack.c.l.b16 %v465
        %v1129 = vunpack.c.h.b16 %v465
        %v1130 = vunpack.c.l.b16 %v466
        %v1131 = vunpack.c.h.b16 %v466
        %v1132 = vunpack.c.l.b16 %v467
        %v1133 = vunpack.c.h.b16 %v467
        %v1134 = vunpack.c.l.b16 %v468
        %v1135 = vunpack.c.h.b16 %v468
        %v1136 = vunpack.c.l.b16 %v469
        %v1137 = vunpack.c.h.b16 %v469
        %v1138 = vunpack.c.l.b16 %v470
        %v1139 = vunpack.c.h.b16 %v470
        %v1140 = vunpack.c.l.b16 %v471
        %v1141 = vunpack.c.h.b16 %v471
        %v1142 = vunpack.c.l.b16 %v472
        %v1143 = vunpack.c.h.b16 %v472
        %v1144 = vunpack.c.l.b16 %v473
        %v1145 = vunpack.c.h.b16 %v473
        %v1146 = vunpack.c.l.b16 %v474
        %v1147 = vunpack.c.h.b16 %v474
        %v1148 = vunpack.c.l.b16 %v475
        %v1149 = vunpack.c.h.b16 %v475
        %v1150 = vunpack.c.l.b16 %v476
        %v1151 = vunpack.c.h.b16 %v476
        %v1152 = vunpack.c.l.b16 %v477
        %v1153 = vunpack.c.h.b16 %v477
        %v1154 = vunpack.c.l.b16 %v478
        %v1155 = vunpack.c.h.b16 %v478
        %v1156 = vunpack.c.l.b16 %v479
        %v1157 = vunpack.c.h.b16 %v479
        %v1158 = vunpack.c.l.b16 %v480
        %v1159 = vunpack.c.h.b16 %v480
        %v1160 = vunpack.c.l.b16 %v481
        %v1161 = vunpack.c.h.b16 %v481
        %v1162 = vunpack.c.l.b16 %v482
        %v1163 = vunpack.c.h.b16 %v482
        %v1164 = vunpack.c.l.b16 %v483
        %v1165 = vunpack.c.h.b16 %v483
        %v1166 = vunpack.c.l.b16 %v484
        %v1167 = vunpack.c.h.b16 %v484
        %v1168 = vunpack.c.l.b16 %v485
        %v1169 = vunpack.c.h.b16 %v485
        %v1170 = vunpack.c.l.b16 %v486
        %v1171 = vunpack.c.h.b16 %v486
        %v1172 = vunpack.c.l.b16 %v487
        %v1173 = vunpack.c.h.b16 %v487
        %v1174 = vunpack.c.l.b16 %v488
        %v1175 = vunpack.c.h.b16 %v488
        %v1176 = vunpack.c.l.b16 %v489
        %v1177 = vunpack.c.h.b16 %v489
        %v1178 = vunpack.c.l.b16 %v490
        %v1179 = vunpack.c.h.b16 %v490
        %v1180 = vunpack.c.l.b16 %v491
        %v1181 = vunpack.c.h.b16 %v491
        %v1182 = vunpack.c.l.b16 %v492
        %v1183 = vunpack.c.h.b16 %v492
        %v1184 = vunpack.c.l.b16 %v493
        %v1185 = vunpack.c.h.b16 %v493
        %v1186 = vunpack.c.l.b16 %v494
        %v1187 = vunpack.c.h.b16 %v494
        %v1188 = vunpack.c.l.b16 %v495
        %v1189 = vunpack.c.h.b16 %v495
        %v1190 = vunpack.c.l.b16 %v496
        %v1191 = vunpack.c.h.b16 %v496
        %v1192 = vunpack.c.l.b16 %v497
        %v1193 = vunpack.c.h.b16 %v497
        %v1194 = vunpack.c.l.b16 %v498
        %v1195 = vunpack.c.h.b16 %v498
        %v1196 = vunpack.c.l.b16 %v499
        %v1197 = vunpack.c.h.b16 %v499
        %v1198 = vunpack.c.l.b16 %v500
        %v1199 = vunpack.c.h.b16 %v500
        %v1200 = vunpack.c.l.b16 %v501
        %v1201 = vunpack.c.h.b16 %v501
        %v1202 = vunpack.c.l.b16 %v502
        %v1203 = vunpack.c.h.b16 %v502
        %v1204 = vunpack.c.l.b16 %v503
        %v1205 = vunpack.c.h.b16 %v503
        %v1206 = vunpack.c.l.b16 %v504
        %v1207 = vunpack.c.h.b16 %v504
        %v1208 = vunpack.c.l.b16 %v505
        %v1209 = vunpack.c.h.b16 %v505
        %v1210 = vunpack.c.l.b16 %v506
        %v1211 = vunpack.c.h.b16 %v506
        %v1212 = vunpack.c.l.b16 %v507
        %v1213 = vunpack.c.h.b16 %v507
        %v1214 = vunpack.c.l.b16 %v508
        %v1215 = vunpack.c.h.b16 %v508
        %v1216 = vunpack.c.l.b16 %v509
        %v1217 = vunpack.c.h.b16 %v509
        %v1218 = vunpack.c.l.b16 %v510
        %v1219 = vunpack.c.h.b16 %v510
        %v1220 = vunpack.c.l.b16 %v511
        %v1221 = vunpack.c.h.b16 %v511
        %v1222 = vunpack.c.l.b16 %v512
        %v1223 = vunpack.c.h.b16 %v512
        %v1224 = vunpack.c.l.b16 %v513
        %v1225 = vunpack.c.h.b16 %v513
        %v1226 = vunpack.c.l.b16 %v514
        %v1227 = vunpack.c.h.b16 %v514
        %v1228 = vunpack.c.l.b16 %v515
        %v1229 = vunpack.c.h.b16 %v515
        %v1230 = vunpack.c.l.b16 %v516
        %v1231 = vunpack.c.h.b16 %v516
        %v1232 = vunpack.c.l.b16 %v517
        %v1233 = vunpack.c.h.b16 %v517
        %v1234 = vunpack.c.l.b16 %v518
        %v1235 = vunpack.c.h.b16 %v518
        %v1236 = vunpack.c.l.b16 %v519
        %v1237 = vunpack.c.h.b16 %v519
        %v1238 = vunpack.c.l.b16 %v520
        %v1239 = vunpack.c.h.b16 %v520
        %v1240 = vunpack.c.l.b16 %v521
        %v1241 = vunpack.c.h.b16 %v521
        %v1242 = vunpack.c.l.b16 %v522
        %v1243 = vunpack.c.h.b16 %v522
        %v1244 = vunpack.c.l.b16 %v523
        %v1245 = vunpack.c.h.b16 %v523
        %v1246 = vunpack.c.l.b16 %v524
        %v1247 = vunpack.c.h.b16 %v524
        %v1248 = vunpack.c.l.b16 %v525
        %v1249 = vunpack.c.h.b16 %v525
        %v1250 = vunpack.c.l.b16 %v526
        %v1251 = vunpack.c.h.b16 %v526
        %v1252 = vunpack.c.l.b16 %v527
        %v1253 = vunpack.c.h.b16 %v527
        %v1254 = vunpack.c.l.b16 %v528
        %v1255 = vunpack.c.h.b16 %v528
        %v1256 = vunpack.c.l.b16 %v529
        %v1257 = vunpack.c.h.b16 %v529
        %v1258 = vunpack.c.l.b16 %v530
        %v1259 = vunpack.c.h.b16 %v530
        %v1260 = vunpack.c.l.b16 %v531
        %v1261 = vunpack.c.h.b16 %v531
        %v1262 = vunpack.c.l.b16 %v532
        %v1263 = vunpack.c.h.b16 %v532
        %v1264 = vunpack.c.l.b16 %v533
        %v1265 = vunpack.c.h.b16 %v533
        %v1266 = vunpack.c.l.b16 %v534
        %v1267 = vunpack.c.h.b16 %v534
        %v1268 = vunpack.c.l.b16 %v535
        %v1269 = vunpack.c.h.b16 %v535
        %v1270 = vunpack.c.l.b16 %v536
        %v1271 = vunpack.c.h.b16 %v536
        %v1272 = vunpack.c.l.b16 %v537
        %v1273 = vunpack.c.h.b16 %v537
        %v1274 = vunpack.c.l.b16 %v538
        %v1275 = vunpack.c.h.b16 %v538
        %v1276 = vunpack.c.l.b16 %v539
        %v1277 = vunpack.c.h.b16 %v539
        %v1278 = vunpack.c.l.b16 %v540
        %v1279 = vunpack.c.h.b16 %v540
        %v1280 = vunpack.c.l.b16 %v541
        %v1281 = vunpack.c.h.b16 %v541
        %v1282 = vunpack.c.l.b16 %v542
        %v1283 = vunpack.c.h.b16 %v542
        %v1284 = vunpack.c.l.b16 %v543
        %v1285 = vunpack.c.h.b16 %v543
        %v1286 = vunpack.c.l.b16 %v544
        %v1287 = vunpack.c.h.b16 %v544
        %v1288 = vunpack.c.l.b16 %v545
        %v1289 = vunpack.c.h.b16 %v545
        %v1290 = vunpack.c.l.b16 %v546
        %v1291 = vunpack.c.h.b16 %v546
        %v1292 = vunpack.c.l.b16 %v547
        %v1293 = vunpack.c.h.b16 %v547
        %v1294 = vunpack.c.l.b16 %v548
        %v1295 = vunpack.c.h.b16 %v548
        %v1296 = vunpack.c.l.b16 %v549
        %v1297 = vunpack.c.h.b16 %v549
        %v1298 = vunpack.c.l.b16 %v550
        %v1299 = vunpack.c.h.b16 %v550
        %v1300 = vunpack.c.l.b16 %v551
        %v1301 = vunpack.c.h.b16 %v551
        %v1302 = vunpack.c.l.b16 %v552
        %v1303 = vunpack.c.h.b16 %v552
        %v1304 = vunpack.c.l.b16 %v553
        %v1305 = vunpack.c.h.b16 %v553
        %v1306 = vunpack.c.l.b16 %v554
        %v1307 = vunpack.c.h.b16 %v554
        %v1308 = vunpack.c.l.b16 %v555
        %v1309 = vunpack.c.h.b16 %v555
        %v1310 = vunpack.c.l.b16 %v556
        %v1311 = vunpack.c.h.b16 %v556
        %v1312 = vunpack.c.l.b16 %v557
        %v1313 = vunpack.c.h.b16 %v557
        %v1314 = vunpack.c.l.b16 %v558
        %v1315 = vunpack.c.h.b16 %v558
        %v1316 = vunpack.c.l.b16 %v559
        %v1317 = vunpack.c.h.b16 %v559
        %v1318 = vunpack.c.l.b16 %v560
        %v1319 = vunpack.c.h.b16 %v560
        %v1320 = vunpack.c.l.b16 %v561
        %v1321 = vunpack.c.h.b16 %v561
        %v1322 = vunpack.c.l.b16 %v562
        %v1323 = vunpack.c.h.b16 %v562
        %v1324 = vunpack.c.l.b16 %v563
        %v1325 = vunpack.c.h.b16 %v563
        %v1326 = vunpack.c.l.b16 %v564
        %v1327 = vunpack.c.h.b16 %v564
        %v1328 = vunpack.c.l.b16 %v565
        %v1329 = vunpack.c.h.b16 %v565
        %v1330 = vunpack.c.l.b16 %v566
        %v1331 = vunpack.c.h.b16 %v566
        %v1332 = vunpack.c.l.b16 %v567
        %v1333 = vunpack.c.h.b16 %v567
        %v1334 = vunpack.c.l.b16 %v568
        %v1335 = vunpack.c.h.b16 %v568
        %v1336 = vunpack.c.l.b16 %v569
        %v1337 = vunpack.c.h.b16 %v569
        %v1338 = vunpack.c.l.b16 %v570
        %v1339 = vunpack.c.h.b16 %v570
        %v1340 = vunpack.c.l.b16 %v571
        %v1341 = vunpack.c.h.b16 %v571
        %v1342 = vunpack.c.l.b16 %v572
        %v1343 = vunpack.c.h.b16 %v572
        %v1344 = vunpack.c.l.b16 %v573
        %v1345 = vunpack.c.h.b16 %v573
        %v1346 = vunpack.c.l.b16 %v574
        %v1347 = vunpack.c.h.b16 %v574
        %v1348 = vunpack.c.l.b16 %v575
        %v1349 = vunpack.c.h.b16 %v575
        %v1350 = vunpack.c.l.b16 %v576
        %v1351 = vunpack.c.h.b16 %v576
        %v1352 = vunpack.c.l.b16 %v577
        %v1353 = vunpack.c.h.b16 %v577
        %v1354 = vunpack.c.l.b16 %v578
        %v1355 = vunpack.c.h.b16 %v578
        %v1356 = vunpack.c.l.b16 %v579
        %v1357 = vunpack.c.h.b16 %v579
        %v1358 = vunpack.c.l.b16 %v580
        %v1359 = vunpack.c.h.b16 %v580
        %v1360 = vunpack.c.l.b16 %v581
        %v1361 = vunpack.c.h.b16 %v581
        %v1362 = vunpack.c.l.b16 %v582
        %v1363 = vunpack.c.h.b16 %v582
        %v1364 = vunpack.c.l.b16 %v583
        %v1365 = vunpack.c.h.b16 %v583
        %v1366 = vunpack.c.l.b16 %v584
        %v1367 = vunpack.c.h.b16 %v584
        %v1368 = vunpack.c.l.b16 %v585
        %v1369 = vunpack.c.h.b16 %v585
        %v1370 = vunpack.c.l.b16 %v586
        %v1371 = vunpack.c.h.b16 %v586
        %v1372 = vunpack.c.l.b16 %v587
        %v1373 = vunpack.c.h.b16 %v587
        %v1374 = vunpack.c.l.b16 %v588
        %v1375 = vunpack.c.h.b16 %v588
        %v1376 = vunpack.c.l.b16 %v589
        %v1377 = vunpack.c.h.b16 %v589
        %v1378 = vunpack.c.l.b16 %v590
        %v1379 = vunpack.c.h.b16 %v590
        %v1380 = vunpack.c.l.b16 %v591
        %v1381 = vunpack.c.h.b16 %v591
        %v1382 = vunpack.c.l.b16 %v592
        %v1383 = vunpack.c.h.b16 %v592
        %v1384 = vunpack.c.l.b16 %v593
        %v1385 = vunpack.c.h.b16 %v593
        %v1386 = vunpack.c.l.b16 %v594
        %v1387 = vunpack.c.h.b16 %v594
        %v1388 = vunpack.c.l.b16 %v595
        %v1389 = vunpack.c.h.b16 %v595
        %v1390 = vunpack.c.l.b16 %v596
        %v1391 = vunpack.c.h.b16 %v596
        %v1392 = vunpack.c.l.b16 %v597
        %v1393 = vunpack.c.h.b16 %v597
        %v1394 = vunpack.c.l.b16 %v598
        %v1395 = vunpack.c.h.b16 %v598
        %v1396 = vunpack.c.l.b16 %v599
        %v1397 = vunpack.c.h.b16 %v599
        %v1398 = vunpack.c.l.b16 %v600
        %v1399 = vunpack.c.h.b16 %v600
        %v1400 = vunpack.c.l.b16 %v601
        %v1401 = vunpack.c.h.b16 %v601
        %v1402 = vunpack.c.l.b16 %v602
        %v1403 = vunpack.c.h.b16 %v602
        %v1404 = vunpack.c.l.b16 %v603
        %v1405 = vunpack.c.h.b16 %v603
        %v1406 = vunpack.c.l.b16 %v604
        %v1407 = vunpack.c.h.b16 %v604
        %v1408 = vunpack.c.l.b16 %v605
        %v1409 = vunpack.c.h.b16 %v605
        %v1410 = vunpack.c.l.b16 %v606
        %v1411 = vunpack.c.h.b16 %v606
        %v1412 = vunpack.c.l.b16 %v607
        %v1413 = vunpack.c.h.b16 %v607
        %v1414 = vunpack.c.l.b16 %v608
        %v1415 = vunpack.c.h.b16 %v608
        %v1416 = vunpack.c.l.b16 %v609
        %v1417 = vunpack.c.h.b16 %v609
        %v1418 = vunpack.c.l.b16 %v610
        %v1419 = vunpack.c.h.b16 %v610
        %v1420 = vunpack.c.l.b16 %v611
        %v1421 = vunpack.c.h.b16 %v611
        %v1422 = vunpack.c.l.b16 %v612
        %v1423 = vunpack.c.h.b16 %v612
        %v1424 = vunpack.c.l.b16 %v613
        %v1425 = vunpack.c.h.b16 %v613
        %v1426 = vunpack.c.l.b16 %v614
        %v1427 = vunpack.c.h.b16 %v614
        %v1428 = vunpack.c.l.b16 %v615
        %v1429 = vunpack.c.h.b16 %v615
        %v1430 = vunpack.c.l.b16 %v616
        %v1431 = vunpack.c.h.b16 %v616
        %v1432 = vunpack.c.l.b16 %v617
        %v1433 = vunpack.c.h.b16 %v617
        %v1434 = vunpack.c.l.b16 %v618
        %v1435 = vunpack.c.h.b16 %v618
        %v1436 = vunpack.c.l.b16 %v619
        %v1437 = vunpack.c.h.b16 %v619
        %v1438 = vunpack.c.l.b16 %v620
        %v1439 = vunpack.c.h.b16 %v620
        %v1440 = vpack.c.b16 %v904, %v902
        %v1441 = vpack.c.b16 %v905, %v903
        %v1442 = vpack.c.b16 %v908, %v906
        %v1443 = vpack.c.b16 %v909, %v907
        %v1444 = vpack.c.b16 %v912, %v910
        %v1445 = vpack.c.b16 %v913, %v911
        %v1446 = vpack.c.b16 %v916, %v914
        %v1447 = vpack.c.b16 %v917, %v915
        %v1448 = vpack.c.b16 %v920, %v918
        %v1449 = vpack.c.b16 %v921, %v919
        %v1450 = vpack.c.b16 %v924, %v922
        %v1451 = vpack.c.b16 %v925, %v923
        %v1452 = vpack.c.b16 %v928, %v926
        %v1453 = vpack.c.b16 %v929, %v927
        %v1454 = vpack.c.b16 %v932, %v930
        %v1455 = vpack.c.b16 %v933, %v931
        %v1456 = vpack.c.b16 %v936, %v934
        %v1457 = vpack.c.b16 %v937, %v935
        %v1458 = vpack.c.b16 %v940, %v938
        %v1459 = vpack.c.b16 %v941, %v939
        %v1460 = vpack.c.b16 %v944, %v942
        %v1461 = vpack.c.b16 %v945, %v943
        %v1462 = vpack.c.b16 %v948, %v946
        %v1463 = vpack.c.b16 %v949, %v947
        %v1464 = vpack.c.b16 %v952, %v950
        %v1465 = vpack.c.b16 %v953, %v951
        %v1466 = vpack.c.b16 %v956, %v954
        %v1467 = vpack.c.b16 %v957, %v955
        %v1468 = vpack.c.b16 %v960, %v958
        %v1469 = vpack.c.b16 %v961, %v959
        %v1470 = vpack.c.b16 %v964, %v962
        %v1471 = vpack.c.b16 %v965, %v963
        %v1472 = vpack.c.b16 %v968, %v966
        %v1473 = vpack.c.b16 %v969, %v967
        %v1474 = vpack.c.b16 %v972, %v970
        %v1475 = vpack.c.b16 %v973, %v971
        %v1476 = vpack.c.b16 %v976, %v974
        %v1477 = vpack.c.b16 %v977, %v975
        %v1478 = vpack.c.b16 %v980, %v978
        %v1479 = vpack.c.b16 %v981, %v979
        %v1480 = vpack.c.b16 %v984, %v982
        %v1481 = vpack.c.b16 %v985, %v983
        %v1482 = vpack.c.b16 %v988, %v986
        %v1483 = vpack.c.b16 %v989, %v987
        %v1484 = vpack.c.b16 %v992, %v990
        %v1485 = vpack.c.b16 %v993, %v991
        %v1486 = vpack.c.b16 %v996, %v994
        %v1487 = vpack.c.b16 %v997, %v995
        %v1488 = vpack.c.b16 %v1000, %v998
        %v1489 = vpack.c.b16 %v1001, %v999
        %v1490 = vpack.c.b16 %v1004, %v1002
        %v1491 = vpack.c.b16 %v1005, %v1003
        %v1492 = vpack.c.b16 %v1008, %v1006
        %v1493 = vpack.c.b16 %v1009, %v1007
        %v1494 = vpack.c.b16 %v1012, %v1010
        %v1495 = vpack.c.b16 %v1013, %v1011
        %v1496 = vpack.c.b16 %v1016, %v1014
        %v1497 = vpack.c.b16 %v1017, %v1015
        %v1498 = vpack.c.b16 %v1020, %v1018
        %v1499 = vpack.c.b16 %v1021, %v1019
        %v1500 = vpack.c.b16 %v1024, %v1022
        %v1501 = vpack.c.b16 %v1025, %v1023
        %v1502 = vpack.c.b16 %v1028, %v1026
        %v1503 = vpack.c.b16 %v1029, %v1027
        %v1504 = vpack.c.b16 %v1032, %v1030
        %v1505 = vpack.c.b16 %v1033, %v1031
        %v1506 = vpack.c.b16 %v1036, %v1034
        %v1507 = vpack.c.b16 %v1037, %v1035
        %v1508 = vpack.c.b16 %v1040, %v1038
        %v1509 = vpack.c.b16 %v1041, %v1039
        %v1510 = vpack.c.b16 %v1044, %v1042
        %v1511 = vpack.c.b16 %v1045, %v1043
        %v1512 = vpack.c.b16 %v1048, %v1046
        %v1513 = vpack.c.b16 %v1049, %v1047
        %v1514 = vpack.c.b16 %v1052, %v1050
        %v1515 = vpack.c.b16 %v1053, %v1051
        %v1516 = vpack.c.b16 %v1056, %v1054
        %v1517 = vpack.c.b16 %v1057, %v1055
        %v1518 = vpack.c.b16 %v1060, %v1058
        %v1519 = vpack.c.b16 %v1061, %v1059
        %v1520 = vpack.c.b16 %v1064, %v1062
        %v1521 = vpack.c.b16 %v1065, %v1063
        %v1522 = vpack.c.b16 %v1068, %v1066
        %v1523 = vpack.c.b16 %v1069, %v1067
        %v1524 = vpack.c.b16 %v1072, %v1070
        %v1525 = vpack.c.b16 %v1073, %v1071
        %v1526 = vpack.c.b16 %v1076, %v1074
        %v1527 = vpack.c.b16 %v1077, %v1075
        %v1528 = vpack.c.b16 %v1080, %v1078
        %v1529 = vpack.c.b16 %v1081, %v1079
        %v1530 = vpack.c.b16 %v1084, %v1082
        %v1531 = vpack.c.b16 %v1085, %v1083
        %v1532 = vpack.c.b16 %v1088, %v1086
        %v1533 = vpack.c.b16 %v1089, %v1087
        %v1534 = vpack.c.b16 %v1092, %v1090
        %v1535 = vpack.c.b16 %v1093, %v1091
        %v1536 = vpack.c.b16 %v1096, %v1094
        %v1537 = vpack.c.b16 %v1097, %v1095
        %v1538 = vpack.c.b16 %v1100, %v1098
        %v1539 = vpack.c.b16 %v1101, %v1099
        %v1540 = vpack.c.b16 %v1104, %v1102
        %v1541 = vpack.c.b16 %v1105, %v1103
        %v1542 = vpack.c.b16 %v1108, %v1106
        %v1543 = vpack.c.b16 %v1109, %v1107
        %v1544 = vpack.c.b16 %v1112, %v1110
        %v1545 = vpack.c.b16 %v1113, %v1111
        %v1546 = vpack.c.b16 %v1116, %v1114
        %v1547 = vpack.c.b16 %v1117, %v1115
        %v1548 = vpack.c.b16 %v1120, %v1118
        %v1549 = vpack.c.b16 %v1121, %v1119
        %v1550 = vpack.c.b16 %v1124, %v1122
        %v1551 = vpack.c.b16 %v1125, %v1123
        %v1552 = vpack.c.b16 %v1128, %v1126
        %v1553 = vpack.c.b16 %v1129, %v1127
        %v1554 = vpack.c.b16 %v1132, %v1130
        %v1555 = vpack.c.b16 %v1133, %v1131
        %v1556 = vpack.c.b16 %v1136, %v1134
        %v1557 = vpack.c.b16 %v1137, %v1135
        %v1558 = vpack.c.b16 %v1140, %v1138
        %v1559 = vpack.c.b16 %v1141, %v1139
        %v1560 = vpack.c.b16 %v1144, %v1142
        %v1561 = vpack.c.b16 %v1145, %v1143
        %v1562 = vpack.c.b16 %v1148, %v1146
        %v1563 = vpack.c.b16 %v1149, %v1147
        %v1564 = vpack.c.b16 %v1152, %v1150
        %v1565 = vpack.c.b16 %v1153, %v1151
        %v1566 = vpack.c.b16 %v1156, %v1154
        %v1567 = vpack.c.b16 %v1157, %v1155
        %v1568 = vpack.c.b16 %v1160, %v1158
        %v1569 = vpack.c.b16 %v1161, %v1159
        %v1570 = vpack.c.b16 %v1164, %v1162
        %v1571 = vpack.c.b16 %v1165, %v1163
        %v1572 = vpack.c.b16 %v1168, %v1166
        %v1573 = vpack.c.b16 %v1169, %v1167
        %v1574 = vpack.c.b16 %v1172, %v1170
        %v1575 = vpack.c.b16 %v1173, %v1171
        %v1576 = vpack.c.b16 %v1176, %v1174
        %v1577 = vpack.c.b16 %v1177, %v1175
        %v1578 = vpack.c.b16 %v1180, %v1178
        %v1579 = vpack.c.b16 %v1181, %v1179
        %v1580 = vpack.c.b16 %v1184, %v1182
        %v1581 = vpack.c.b16 %v1185, %v1183
        %v1582 = vpack.c.b16 %v1188, %v1186
        %v1583 = vpack.c.b16 %v1189, %v1187
        %v1584 = vpack.c.b16 %v1192, %v1190
        %v1585 = vpack.c.b16 %v1193, %v1191
        %v1586 = vpack.c.b16 %v1196, %v1194
        %v1587 = vpack.c.b16 %v1197, %v1195
        %v1588 = vpack.c.b16 %v1200, %v1198
        %v1589 = vpack.c.b16 %v1201, %v1199
        %v1590 = vpack.c.b16 %v1204, %v1202
        %v1591 = vpack.c.b16 %v1205, %v1203
        %v1592 = vpack.c.b16 %v1208, %v1206
        %v1593 = vpack.c.b16 %v1209, %v1207
        %v1594 = vpack.c.b16 %v1212, %v1210
        %v1595 = vpack.c.b16 %v1213, %v1211
        %v1596 = vpack.c.b16 %v1216, %v1214
        %v1597 = vpack.c.b16 %v1217, %v1215
        %v1598 = vpack.c.b16 %v1220, %v1218
        %v1599 = vpack.c.b16 %v1221, %v1219
        %v1600 = vpack.c.b16 %v1224, %v1222
        %v1601 = vpack.c.b16 %v1225, %v1223
        %v1602 = vpack.c.b16 %v1228, %v1226
        %v1603 = vpack.c.b16 %v1229, %v1227
        %v1604 = vpack.c.b16 %v1232, %v1230
        %v1605 = vpack.c.b16 %v1233, %v1231
        %v1606 = vpack.c.b16 %v1236, %v1234
        %v1607 = vpack.c.b16 %v1237, %v1235
        %v1608 = vpack.c.b16 %v1240, %v1238
        %v1609 = vpack.c.b16 %v1241, %v1239
        %v1610 = vpack.c.b16 %v1244, %v1242
        %v1611 = vpack.c.b16 %v1245, %v1243
        %v1612 = vpack.c.b16 %v1248, %v1246
        %v1613 = vpack.c.b16 %v1249, %v1247
        %v1614 = vpack.c.b16 %v1252, %v1250
        %v1615 = vpack.c.b16 %v1253, %v1251
        %v1616 = vpack.c.b16 %v1256, %v1254
        %v1617 = vpack.c.b16 %v1257, %v1255
        %v1618 = vpack.c.b16 %v1260, %v1258
        %v1619 = vpack.c.b16 %v1261, %v1259
        %v1620 = vpack.c.b16 %v1264, %v1262
        %v1621 = vpack.c.b16 %v1265, %v1263
        %v1622 = vpack.c.b16 %v1268, %v1266
        %v1623 = vpack.c.b16 %v1269, %v1267
        %v1624 = vpack.c.b16 %v1272, %v1270
        %v1625 = vpack.c.b16 %v1273, %v1271
        %v1626 = vpack.c.b16 %v1276, %v1274
        %v1627 = vpack.c.b16 %v1277, %v1275
        %v1628 = vpack.c.b16 %v1280, %v1278
        %v1629 = vpack.c.b16 %v1281, %v1279
        %v1630 = vpack.c.b16 %v1284, %v1282
        %v1631 = vpack.c.b16 %v1285, %v1283
        %v1632 = vpack.c.b16 %v1288, %v1286
        %v1633 = vpack.c.b16 %v1289, %v1287
        %v1634 = vpack.c.b16 %v1292, %v1290
        %v1635 = vpack.c.b16 %v1293, %v1291
        %v1636 = vpack.c.b16 %v1296, %v1294
        %v1637 = vpack.c.b16 %v1297, %v1295
        %v1638 = vpack.c.b16 %v1300, %v1298
        %v1639 = vpack.c.b16 %v1301, %v1299
        %v1640 = vpack.c.b16 %v1304, %v1302
        %v1641 = vpack.c.b16 %v1305, %v1303
        %v1642 = vpack.c.b16 %v1308, %v1306
        %v1643 = vpack.c.b16 %v1309, %v1307
        %v1644 = vpack.c.b16 %v1312, %v1310
        %v1645 = vpack.c.b16 %v1313, %v1311
        %v1646 = vpack.c.b16 %v1316, %v1314
        %v1647 = vpack.c.b16 %v1317, %v1315
        %v1648 = vpack.c.b16 %v1320, %v1318
        %v1649 = vpack.c.b16 %v1321, %v1319
        %v1650 = vpack.c.b16 %v1324, %v1322
        %v1651 = vpack.c.b16 %v1325, %v1323
        %v1652 = vpack.c.b16 %v1328, %v1326
        %v1653 = vpack.c.b16 %v1329, %v1327
        %v1654 = vpack.c.b16 %v1332, %v1330
        %v1655 = vpack.c.b16 %v1333, %v1331
        %v1656 = vpack.c.b16 %v1336, %v1334
        %v1657 = vpack.c.b16 %v1337, %v1335
        %v1658 = vpack.c.b16 %v1340, %v1338
        %v1659 = vpack.c.b16 %v1341, %v1339
        %v1660 = vpack.c.b16 %v1344, %v1342
        %v1661 = vpack.c.b16 %v1345, %v1343
        %v1662 = vpack.c.b16 %v1348, %v1346
        %v1663 = vpack.c.b16 %v1349, %v1347
        %v1664 = vpack.c.b16 %v1352, %v1350
        %v1665 = vpack.c.b16 %v1353, %v1351
        %v1666 = vpack.c.b16 %v1356, %v1354
        %v1667 = vpack.c.b16 %v1357, %v1355
        %v1668 = vpack.c.b16 %v1360, %v1358
        %v1669 = vpack.c.b16 %v1361, %v1359
        %v1670 = vpack.c.b16 %v1364, %v1362
        %v1671 = vpack.c.b16 %v1365, %v1363
        %v1672 = vpack.c.b16 %v1368, %v1366
        %v1673 = vpack.c.b16 %v1369, %v1367
        %v1674 = vpack.c.b16 %v1372, %v1370
        %v1675 = vpack.c.b16 %v1373, %v1371
        %v1676 = vpack.c.b16 %v1376, %v1374
        %v1677 = vpack.c.b16 %v1377, %v1375
        %v1678 = vpack.c.b16 %v1380, %v1378
        %v1679 = vpack.c.b16 %v1381, %v1379
        %v1680 = vpack.c.b16 %v1384, %v1382
        %v1681 = vpack.c.b16 %v1385, %v1383
        %v1682 = vpack.c.b16 %v1388, %v1386
        %v1683 = vpack.c.b16 %v1389, %v1387
        %v1684 = vpack.c.b16 %v1392, %v1390
        %v1685 = vpack.c.b16 %v1393, %v1391
        %v1686 = vpack.c.b16 %v1396, %v1394
        %v1687 = vpack.c.b16 %v1397, %v1395
        %v1688 = vpack.c.b16 %v1400, %v1398
        %v1689 = vpack.c.b16 %v1401, %v1399
        %v1690 = vpack.c.b16 %v1404, %v1402
        %v1691 = vpack.c.b16 %v1405, %v1403
        %v1692 = vpack.c.b16 %v1408, %v1406
        %v1693 = vpack.c.b16 %v1409, %v1407
        %v1694 = vpack.c.b16 %v1412, %v1410
        %v1695 = vpack.c.b16 %v1413, %v1411
        %v1696 = vpack.c.b16 %v1416, %v1414
        %v1697 = vpack.c.b16 %v1417, %v1415
        %v1698 = vpack.c.b16 %v1420, %v1418
        %v1699 = vpack.c.b16 %v1421, %v1419
        %v1700 = vpack.c.b16 %v1424, %v1422
        %v1701 = vpack.c.b16 %v1425, %v1423
        %v1702 = vpack.c.b16 %v1428, %v1426
        %v1703 = vpack.c.b16 %v1429, %v1427
        %v1704 = vpack.c.b16 %v1432, %v1430
        %v1705 = vpack.c.b16 %v1433, %v1431
        %v1706 = vpack.c.b16 %v1436, %v1434
        %v1707 = vpack.c.b16 %v1437, %v1435
        %v1708 = vpack.c.b16 %v1438, %v1438
        %v1709 = vpack.c.b16 %v1439, %v1439
        %vm1978 = vcmask 842752
        %v1980 = vsel %vm1978, %v351, 0
        %vm1982 = vcmask 1042432
        %vm1983 = vcmask 1043456
        %v1984 = vsel %vm1982, 4294967295, 65535
        %v1985 = vsel %vm1983, %v1984, 0
        %v1987 = vand.u32 %v1708, %v1985
        %v1990 = vand.u32 %v1709, %v1985
        %1992 = vmatprep.subr.bf16.mxu0 %v1441
        %1993 = vmatpush1.bf16.msra.mxu0 %v1440
        %1994 = vmatprep.subr.bf16.mxu0 %v1443
        %1995 = vmatpush1.bf16.msra.mxu0 %v1442
        %1996 = vmatprep.subr.bf16.mxu0 %v1445
        %1997 = vmatpush1.bf16.msra.mxu0 %v1444
        %1998 = vmatprep.subr.bf16.mxu0 %v1447
        %1999 = vmatpush1.bf16.msra.mxu0 %v1446
        %2000 = vmatprep.subr.bf16.mxu0 %v1449
        %2001 = vmatpush1.bf16.msra.mxu0 %v1448
        %2002 = vmatprep.subr.bf16.mxu0 %v1451
        %2003 = vmatpush1.bf16.msra.mxu0 %v1450
        %2004 = vmatprep.subr.bf16.mxu0 %v1453
        %2005 = vmatpush1.bf16.msra.mxu0 %v1452
        %2006 = vmatprep.subr.bf16.mxu0 %v1455
        %2007 = vmatpush1.bf16.msra.mxu0 %v1454
        %2008 = vmatprep.subr.bf16.mxu0 %v1457
        %2009 = vmatpush1.bf16.msra.mxu0 %v1456
        %2010 = vmatprep.subr.bf16.mxu0 %v1459
        %2011 = vmatpush1.bf16.msra.mxu0 %v1458
        %2012 = vmatprep.subr.bf16.mxu0 %v1461
        %2013 = vmatpush1.bf16.msra.mxu0 %v1460
        %2014 = vmatprep.subr.bf16.mxu0 %v1463
        %2015 = vmatpush1.bf16.msra.mxu0 %v1462
        %2016 = vmatprep.subr.bf16.mxu0 %v1465
        %2017 = vmatpush1.bf16.msra.mxu0 %v1464
        %2018 = vmatprep.subr.bf16.mxu0 %v1467
        %2019 = vmatpush1.bf16.msra.mxu0 %v1466
        %2020 = vmatprep.subr.bf16.mxu0 %v1469
        %2021 = vmatpush1.bf16.msra.mxu0 %v1468
        %2022 = vmatprep.subr.bf16.mxu0 %v1471
        %2023 = vmatpush1.bf16.msra.mxu0 %v1470
        %2024 = vmatprep.mubr.bf16.mxu0 %v336
        %2025 = vmatmul.mubr.bf16.gmra.mrb[0].mxu0 %v335
        %v2026 = vpop.f32.mrb[0].mxu0
        %v2027 = vadd.f32 %v626, %v2026
        %v2028 = vpop.f32.mrb[0].mxu0
        %v2029 = vadd.f32 %v630, %v2028
        %v2030 = vpop.f32.mrb[0].mxu0
        %v2031 = vadd.f32 %v626, %v2030
        %v2032 = vpop.f32.mrb[0].mxu0
        %v2033 = vadd.f32 %v630, %v2032
        %2034 = vdwg.mxu0
        %2035 = vmatprep.subr.bf16.mxu0 %v1473
        %2036 = vmatpush1.bf16.msra.mxu0 %v1472
        %2037 = vmatprep.subr.bf16.mxu0 %v1475
        %2038 = vmatpush1.bf16.msra.mxu0 %v1474
        %2039 = vmatprep.subr.bf16.mxu0 %v1477
        %2040 = vmatpush1.bf16.msra.mxu0 %v1476
        %2041 = vmatprep.subr.bf16.mxu0 %v1479
        %2042 = vmatpush1.bf16.msra.mxu0 %v1478
        %2043 = vmatprep.subr.bf16.mxu0 %v1481
        %2044 = vmatpush1.bf16.msra.mxu0 %v1480
        %2045 = vmatprep.subr.bf16.mxu0 %v1483
        %2046 = vmatpush1.bf16.msra.mxu0 %v1482
        %2047 = vmatprep.subr.bf16.mxu0 %v1485
        %2048 = vmatpush1.bf16.msra.mxu0 %v1484
        %2049 = vmatprep.subr.bf16.mxu0 %v1487
        %2050 = vmatpush1.bf16.msra.mxu0 %v1486
        %2051 = vmatprep.subr.bf16.mxu0 %v1489
        %2052 = vmatpush1.bf16.msra.mxu0 %v1488
        %2053 = vmatprep.subr.bf16.mxu0 %v1491
        %2054 = vmatpush1.bf16.msra.mxu0 %v1490
        %2055 = vmatprep.subr.bf16.mxu0 %v1493
        %2056 = vmatpush1.bf16.msra.mxu0 %v1492
        %2057 = vmatprep.subr.bf16.mxu0 %v1495
        %2058 = vmatpush1.bf16.msra.mxu0 %v1494
        %2059 = vmatprep.subr.bf16.mxu0 %v1497
        %2060 = vmatpush1.bf16.msra.mxu0 %v1496
        %2061 = vmatprep.subr.bf16.mxu0 %v1499
        %2062 = vmatpush1.bf16.msra.mxu0 %v1498
        %2063 = vmatprep.subr.bf16.mxu0 %v1501
        %2064 = vmatpush1.bf16.msra.mxu0 %v1500
        %2065 = vmatprep.subr.bf16.mxu0 %v1503
        %2066 = vmatpush1.bf16.msra.mxu0 %v1502
        %2067 = vmatprep.mubr.bf16.mxu0 %v338
        %2068 = vmatmul.mubr.bf16.gmra.mrb[0].mxu0 %v337
        %v2069 = vpop.f32.mrb[0].mxu0
        %v2070 = vadd.f32 %v2027, %v2069
        %v2071 = vpop.f32.mrb[0].mxu0
        %v2072 = vadd.f32 %v2029, %v2071
        %v2073 = vpop.f32.mrb[0].mxu0
        %v2074 = vadd.f32 %v2031, %v2073
        %v2075 = vpop.f32.mrb[0].mxu0
        %v2076 = vadd.f32 %v2033, %v2075
        %2077 = vdwg.mxu0
        %2078 = vmatprep.subr.bf16.mxu0 %v1505
        %2079 = vmatpush1.bf16.msra.mxu0 %v1504
        %2080 = vmatprep.subr.bf16.mxu0 %v1507
        %2081 = vmatpush1.bf16.msra.mxu0 %v1506
        %2082 = vmatprep.subr.bf16.mxu0 %v1509
        %2083 = vmatpush1.bf16.msra.mxu0 %v1508
        %2084 = vmatprep.subr.bf16.mxu0 %v1511
        %2085 = vmatpush1.bf16.msra.mxu0 %v1510
        %2086 = vmatprep.subr.bf16.mxu0 %v1513
        %2087 = vmatpush1.bf16.msra.mxu0 %v1512
        %2088 = vmatprep.subr.bf16.mxu0 %v1515
        %2089 = vmatpush1.bf16.msra.mxu0 %v1514
        %2090 = vmatprep.subr.bf16.mxu0 %v1517
        %2091 = vmatpush1.bf16.msra.mxu0 %v1516
        %2092 = vmatprep.subr.bf16.mxu0 %v1519
        %2093 = vmatpush1.bf16.msra.mxu0 %v1518
        %2094 = vmatprep.subr.bf16.mxu0 %v1521
        %2095 = vmatpush1.bf16.msra.mxu0 %v1520
        %2096 = vmatprep.subr.bf16.mxu0 %v1523
        %2097 = vmatpush1.bf16.msra.mxu0 %v1522
        %2098 = vmatprep.subr.bf16.mxu0 %v1525
        %2099 = vmatpush1.bf16.msra.mxu0 %v1524
        %2100 = vmatprep.subr.bf16.mxu0 %v1527
        %2101 = vmatpush1.bf16.msra.mxu0 %v1526
        %2102 = vmatprep.subr.bf16.mxu0 %v1529
        %2103 = vmatpush1.bf16.msra.mxu0 %v1528
        %2104 = vmatprep.subr.bf16.mxu0 %v1531
        %2105 = vmatpush1.bf16.msra.mxu0 %v1530
        %2106 = vmatprep.subr.bf16.mxu0 %v1533
        %2107 = vmatpush1.bf16.msra.mxu0 %v1532
        %2108 = vmatprep.subr.bf16.mxu0 %v1535
        %2109 = vmatpush1.bf16.msra.mxu0 %v1534
        %2110 = vmatprep.mubr.bf16.mxu0 %v340
        %2111 = vmatmul.mubr.bf16.gmra.mrb[0].mxu0 %v339
        %v2112 = vpop.f32.mrb[0].mxu0
        %v2113 = vadd.f32 %v2070, %v2112
        %v2114 = vpop.f32.mrb[0].mxu0
        %v2115 = vadd.f32 %v2072, %v2114
        %v2116 = vpop.f32.mrb[0].mxu0
        %v2117 = vadd.f32 %v2074, %v2116
        %v2118 = vpop.f32.mrb[0].mxu0
        %v2119 = vadd.f32 %v2076, %v2118
        %2120 = vdwg.mxu0
        %2121 = vmatprep.subr.bf16.mxu0 %v1537
        %2122 = vmatpush1.bf16.msra.mxu0 %v1536
        %2123 = vmatprep.subr.bf16.mxu0 %v1539
        %2124 = vmatpush1.bf16.msra.mxu0 %v1538
        %2125 = vmatprep.subr.bf16.mxu0 %v1541
        %2126 = vmatpush1.bf16.msra.mxu0 %v1540
        %2127 = vmatprep.subr.bf16.mxu0 %v1543
        %2128 = vmatpush1.bf16.msra.mxu0 %v1542
        %2129 = vmatprep.subr.bf16.mxu0 %v1545
        %2130 = vmatpush1.bf16.msra.mxu0 %v1544
        %2131 = vmatprep.subr.bf16.mxu0 %v1547
        %2132 = vmatpush1.bf16.msra.mxu0 %v1546
        %2133 = vmatprep.subr.bf16.mxu0 %v1549
        %2134 = vmatpush1.bf16.msra.mxu0 %v1548
        %2135 = vmatprep.subr.bf16.mxu0 %v1551
        %2136 = vmatpush1.bf16.msra.mxu0 %v1550
        %2137 = vmatprep.subr.bf16.mxu0 %v1553
        %2138 = vmatpush1.bf16.msra.mxu0 %v1552
        %2139 = vmatprep.subr.bf16.mxu0 %v1555
        %2140 = vmatpush1.bf16.msra.mxu0 %v1554
        %2141 = vmatprep.subr.bf16.mxu0 %v1557
        %2142 = vmatpush1.bf16.msra.mxu0 %v1556
        %2143 = vmatprep.subr.bf16.mxu0 %v1559
        %2144 = vmatpush1.bf16.msra.mxu0 %v1558
        %2145 = vmatprep.subr.bf16.mxu0 %v1561
        %2146 = vmatpush1.bf16.msra.mxu0 %v1560
        %2147 = vmatprep.subr.bf16.mxu0 %v1563
        %2148 = vmatpush1.bf16.msra.mxu0 %v1562
        %2149 = vmatprep.subr.bf16.mxu0 %v1565
        %2150 = vmatpush1.bf16.msra.mxu0 %v1564
        %2151 = vmatprep.subr.bf16.mxu0 %v1567
        %2152 = vmatpush1.bf16.msra.mxu0 %v1566
        %2153 = vmatprep.mubr.bf16.mxu0 %v342
        %2154 = vmatmul.mubr.bf16.gmra.mrb[0].mxu0 %v341
        %v2155 = vpop.f32.mrb[0].mxu0
        %v2156 = vadd.f32 %v2113, %v2155
        %v2157 = vpop.f32.mrb[0].mxu0
        %v2158 = vadd.f32 %v2115, %v2157
        %v2159 = vpop.f32.mrb[0].mxu0
        %v2160 = vadd.f32 %v2117, %v2159
        %v2161 = vpop.f32.mrb[0].mxu0
        %v2162 = vadd.f32 %v2119, %v2161
        %2163 = vdwg.mxu0
        %2164 = vmatprep.subr.bf16.mxu0 %v1569
        %2165 = vmatpush1.bf16.msra.mxu0 %v1568
        %2166 = vmatprep.subr.bf16.mxu0 %v1571
        %2167 = vmatpush1.bf16.msra.mxu0 %v1570
        %2168 = vmatprep.subr.bf16.mxu0 %v1573
        %2169 = vmatpush1.bf16.msra.mxu0 %v1572
        %2170 = vmatprep.subr.bf16.mxu0 %v1575
        %2171 = vmatpush1.bf16.msra.mxu0 %v1574
        %2172 = vmatprep.subr.bf16.mxu0 %v1577
        %2173 = vmatpush1.bf16.msra.mxu0 %v1576
        %2174 = vmatprep.subr.bf16.mxu0 %v1579
        %2175 = vmatpush1.bf16.msra.mxu0 %v1578
        %2176 = vmatprep.subr.bf16.mxu0 %v1581
        %2177 = vmatpush1.bf16.msra.mxu0 %v1580
        %2178 = vmatprep.subr.bf16.mxu0 %v1583
        %2179 = vmatpush1.bf16.msra.mxu0 %v1582
        %2180 = vmatprep.subr.bf16.mxu0 %v1585
        %2181 = vmatpush1.bf16.msra.mxu0 %v1584
        %2182 = vmatprep.subr.bf16.mxu0 %v1587
        %2183 = vmatpush1.bf16.msra.mxu0 %v1586
        %2184 = vmatprep.subr.bf16.mxu0 %v1589
        %2185 = vmatpush1.bf16.msra.mxu0 %v1588
        %2186 = vmatprep.subr.bf16.mxu0 %v1591
        %2187 = vmatpush1.bf16.msra.mxu0 %v1590
        %2188 = vmatprep.subr.bf16.mxu0 %v1593
        %2189 = vmatpush1.bf16.msra.mxu0 %v1592
        %2190 = vmatprep.subr.bf16.mxu0 %v1595
        %2191 = vmatpush1.bf16.msra.mxu0 %v1594
        %2192 = vmatprep.subr.bf16.mxu0 %v1597
        %2193 = vmatpush1.bf16.msra.mxu0 %v1596
        %2194 = vmatprep.subr.bf16.mxu0 %v1599
        %2195 = vmatpush1.bf16.msra.mxu0 %v1598
        %2196 = vmatprep.mubr.bf16.mxu0 %v344
        %2197 = vmatmul.mubr.bf16.gmra.mrb[0].mxu0 %v343
        %v2198 = vpop.f32.mrb[0].mxu0
        %v2199 = vadd.f32 %v2156, %v2198
        %v2200 = vpop.f32.mrb[0].mxu0
        %v2201 = vadd.f32 %v2158, %v2200
        %v2202 = vpop.f32.mrb[0].mxu0
        %v2203 = vadd.f32 %v2160, %v2202
        %v2204 = vpop.f32.mrb[0].mxu0
        %v2205 = vadd.f32 %v2162, %v2204
        %2206 = vdwg.mxu0
        %2207 = vmatprep.subr.bf16.mxu0 %v1601
        %2208 = vmatpush1.bf16.msra.mxu0 %v1600
        %2209 = vmatprep.subr.bf16.mxu0 %v1603
        %2210 = vmatpush1.bf16.msra.mxu0 %v1602
        %2211 = vmatprep.subr.bf16.mxu0 %v1605
        %2212 = vmatpush1.bf16.msra.mxu0 %v1604
        %2213 = vmatprep.subr.bf16.mxu0 %v1607
        %2214 = vmatpush1.bf16.msra.mxu0 %v1606
        %2215 = vmatprep.subr.bf16.mxu0 %v1609
        %2216 = vmatpush1.bf16.msra.mxu0 %v1608
        %2217 = vmatprep.subr.bf16.mxu0 %v1611
        %2218 = vmatpush1.bf16.msra.mxu0 %v1610
        %2219 = vmatprep.subr.bf16.mxu0 %v1613
        %2220 = vmatpush1.bf16.msra.mxu0 %v1612
        %2221 = vmatprep.subr.bf16.mxu0 %v1615
        %2222 = vmatpush1.bf16.msra.mxu0 %v1614
        %2223 = vmatprep.subr.bf16.mxu0 %v1617
        %2224 = vmatpush1.bf16.msra.mxu0 %v1616
        %2225 = vmatprep.subr.bf16.mxu0 %v1619
        %2226 = vmatpush1.bf16.msra.mxu0 %v1618
        %2227 = vmatprep.subr.bf16.mxu0 %v1621
        %2228 = vmatpush1.bf16.msra.mxu0 %v1620
        %2229 = vmatprep.subr.bf16.mxu0 %v1623
        %2230 = vmatpush1.bf16.msra.mxu0 %v1622
        %2231 = vmatprep.subr.bf16.mxu0 %v1625
        %2232 = vmatpush1.bf16.msra.mxu0 %v1624
        %2233 = vmatprep.subr.bf16.mxu0 %v1627
        %2234 = vmatpush1.bf16.msra.mxu0 %v1626
        %2235 = vmatprep.subr.bf16.mxu0 %v1629
        %2236 = vmatpush1.bf16.msra.mxu0 %v1628
        %2237 = vmatprep.subr.bf16.mxu0 %v1631
        %2238 = vmatpush1.bf16.msra.mxu0 %v1630
        %2239 = vmatprep.mubr.bf16.mxu0 %v346
        %2240 = vmatmul.mubr.bf16.gmra.mrb[0].mxu0 %v345
        %v2241 = vpop.f32.mrb[0].mxu0
        %v2242 = vadd.f32 %v2199, %v2241
        %v2243 = vpop.f32.mrb[0].mxu0
        %v2244 = vadd.f32 %v2201, %v2243
        %v2245 = vpop.f32.mrb[0].mxu0
        %v2246 = vadd.f32 %v2203, %v2245
        %v2247 = vpop.f32.mrb[0].mxu0
        %v2248 = vadd.f32 %v2205, %v2247
        %2249 = vdwg.mxu0
        %2250 = vmatprep.subr.bf16.mxu0 %v1633
        %2251 = vmatpush1.bf16.msra.mxu0 %v1632
        %2252 = vmatprep.subr.bf16.mxu0 %v1635
        %2253 = vmatpush1.bf16.msra.mxu0 %v1634
        %2254 = vmatprep.subr.bf16.mxu0 %v1637
        %2255 = vmatpush1.bf16.msra.mxu0 %v1636
        %2256 = vmatprep.subr.bf16.mxu0 %v1639
        %2257 = vmatpush1.bf16.msra.mxu0 %v1638
        %2258 = vmatprep.subr.bf16.mxu0 %v1641
        %2259 = vmatpush1.bf16.msra.mxu0 %v1640
        %2260 = vmatprep.subr.bf16.mxu0 %v1643
        %2261 = vmatpush1.bf16.msra.mxu0 %v1642
        %2262 = vmatprep.subr.bf16.mxu0 %v1645
        %2263 = vmatpush1.bf16.msra.mxu0 %v1644
        %2264 = vmatprep.subr.bf16.mxu0 %v1647
        %2265 = vmatpush1.bf16.msra.mxu0 %v1646
        %2266 = vmatprep.subr.bf16.mxu0 %v1649
        %2267 = vmatpush1.bf16.msra.mxu0 %v1648
        %2268 = vmatprep.subr.bf16.mxu0 %v1651
        %2269 = vmatpush1.bf16.msra.mxu0 %v1650
        %2270 = vmatprep.subr.bf16.mxu0 %v1653
        %2271 = vmatpush1.bf16.msra.mxu0 %v1652
        %2272 = vmatprep.subr.bf16.mxu0 %v1655
        %2273 = vmatpush1.bf16.msra.mxu0 %v1654
        %2274 = vmatprep.subr.bf16.mxu0 %v1657
        %2275 = vmatpush1.bf16.msra.mxu0 %v1656
        %2276 = vmatprep.subr.bf16.mxu0 %v1659
        %2277 = vmatpush1.bf16.msra.mxu0 %v1658
        %2278 = vmatprep.subr.bf16.mxu0 %v1661
        %2279 = vmatpush1.bf16.msra.mxu0 %v1660
        %2280 = vmatprep.subr.bf16.mxu0 %v1663
        %2281 = vmatpush1.bf16.msra.mxu0 %v1662
        %2282 = vmatprep.mubr.bf16.mxu0 %v348
        %2283 = vmatmul.mubr.bf16.gmra.mrb[0].mxu0 %v347
        %v2284 = vpop.f32.mrb[0].mxu0
        %v2285 = vadd.f32 %v2242, %v2284
        %v2286 = vpop.f32.mrb[0].mxu0
        %v2287 = vadd.f32 %v2244, %v2286
        %v2288 = vpop.f32.mrb[0].mxu0
        %v2289 = vadd.f32 %v2246, %v2288
        %v2290 = vpop.f32.mrb[0].mxu0
        %v2291 = vadd.f32 %v2248, %v2290
        %2292 = vdwg.mxu0
        %2293 = vmatprep.subr.bf16.mxu0 %v1665
        %2294 = vmatpush1.bf16.msra.mxu0 %v1664
        %2295 = vmatprep.subr.bf16.mxu0 %v1667
        %2296 = vmatpush1.bf16.msra.mxu0 %v1666
        %2297 = vmatprep.subr.bf16.mxu0 %v1669
        %2298 = vmatpush1.bf16.msra.mxu0 %v1668
        %2299 = vmatprep.subr.bf16.mxu0 %v1671
        %2300 = vmatpush1.bf16.msra.mxu0 %v1670
        %2301 = vmatprep.subr.bf16.mxu0 %v1673
        %2302 = vmatpush1.bf16.msra.mxu0 %v1672
        %2303 = vmatprep.subr.bf16.mxu0 %v1675
        %2304 = vmatpush1.bf16.msra.mxu0 %v1674
        %2305 = vmatprep.subr.bf16.mxu0 %v1677
        %2306 = vmatpush1.bf16.msra.mxu0 %v1676
        %2307 = vmatprep.subr.bf16.mxu0 %v1679
        %2308 = vmatpush1.bf16.msra.mxu0 %v1678
        %2309 = vmatprep.subr.bf16.mxu0 %v1681
        %2310 = vmatpush1.bf16.msra.mxu0 %v1680
        %2311 = vmatprep.subr.bf16.mxu0 %v1683
        %2312 = vmatpush1.bf16.msra.mxu0 %v1682
        %2313 = vmatprep.subr.bf16.mxu0 %v1685
        %2314 = vmatpush1.bf16.msra.mxu0 %v1684
        %2315 = vmatprep.subr.bf16.mxu0 %v1687
        %2316 = vmatpush1.bf16.msra.mxu0 %v1686
        %2317 = vmatprep.subr.bf16.mxu0 %v1689
        %2318 = vmatpush1.bf16.msra.mxu0 %v1688
        %2319 = vmatprep.subr.bf16.mxu0 %v1691
        %2320 = vmatpush1.bf16.msra.mxu0 %v1690
        %2321 = vmatprep.subr.bf16.mxu0 %v1693
        %2322 = vmatpush1.bf16.msra.mxu0 %v1692
        %2323 = vmatprep.subr.bf16.mxu0 %v1695
        %2324 = vmatpush1.bf16.msra.mxu0 %v1694
        %2325 = vmatprep.mubr.bf16.mxu0 %v350
        %2326 = vmatmul.mubr.bf16.gmra.mrb[0].mxu0 %v349
        %v2327 = vpop.f32.mrb[0].mxu0
        %v2328 = vadd.f32 %v2285, %v2327
        %v2329 = vpop.f32.mrb[0].mxu0
        %v2330 = vadd.f32 %v2287, %v2329
        %v2331 = vpop.f32.mrb[0].mxu0
        %v2332 = vadd.f32 %v2289, %v2331
        %v2333 = vpop.f32.mrb[0].mxu0
        %v2334 = vadd.f32 %v2291, %v2333
        %2335 = vdwg.mxu0
        %2336 = vmatprep.subr.bf16.mxu0 %v1697
        %2337 = vmatpush1.bf16.msra.mxu0 %v1696
        %2338 = vmatprep.subr.bf16.mxu0 %v1699
        %2339 = vmatpush1.bf16.msra.mxu0 %v1698
        %2340 = vmatprep.subr.bf16.mxu0 %v1701
        %2341 = vmatpush1.bf16.msra.mxu0 %v1700
        %2342 = vmatprep.subr.bf16.mxu0 %v1703
        %2343 = vmatpush1.bf16.msra.mxu0 %v1702
        %2344 = vmatprep.subr.bf16.mxu0 %v1705
        %2345 = vmatpush1.bf16.msra.mxu0 %v1704
        %2346 = vmatprep.subr.bf16.mxu0 %v1707
        %2347 = vmatpush1.bf16.msra.mxu0 %v1706
        %2348 = vmatprep.subr.bf16.mxu0 %v1990
        %2349 = vmatpush1.bf16.msra.mxu0 %v1987
        %2350 = vmatprep.subr.bf16.mxu0 0
        %2351 = vmatpush1.bf16.msra.mxu0 0
        %2352 = vmatprep.subr.bf16.mxu0 0
        %2353 = vmatpush1.bf16.msra.mxu0 0
        %2354 = vmatprep.subr.bf16.mxu0 0
        %2355 = vmatpush1.bf16.msra.mxu0 0
        %2356 = vmatprep.subr.bf16.mxu0 0
        %2357 = vmatpush1.bf16.msra.mxu0 0
        %2358 = vmatprep.subr.bf16.mxu0 0
        %2359 = vmatpush1.bf16.msra.mxu0 0
        %2360 = vmatprep.subr.bf16.mxu0 0
        %2361 = vmatpush1.bf16.msra.mxu0 0
        %2362 = vmatprep.subr.bf16.mxu0 0
        %2363 = vmatpush1.bf16.msra.mxu0 0
        %2364 = vmatprep.subr.bf16.mxu0 0
        %2365 = vmatpush1.bf16.msra.mxu0 0
        %2366 = vmatprep.subr.bf16.mxu0 0
        %2367 = vmatpush1.bf16.msra.mxu0 0
        %2368 = vmatprep.mubr.bf16.mxu0 0
        %2369 = vmatmul.mubr.bf16.gmra.mrb[0].mxu0 %v1980
        %v2370 = vpop.f32.mrb[0].mxu0
        %v2371 = vadd.f32 %v2328, %v2370
        %v2372 = vpop.f32.mrb[0].mxu0
        %v2373 = vadd.f32 %v2330, %v2372
        %v2374 = vpop.f32.mrb[0].mxu0
        %v2375 = vadd.f32 %v2332, %v2374
        %v2376 = vpop.f32.mrb[0].mxu0
        %v2377 = vadd.f32 %v2334, %v2376
        %2378 = vdwg.mxu0
        %v2379 = vmax.f32 %v2371, 0.0
        %v2380 = vmax.f32 %v2373, 0.0
        %v2381 = vmax.f32 %v2375, 0.0
        %v2382 = vmax.f32 %v2377, 0.0
        %v2383 = vld [vmem:[#allocation8] sm:$0x3]
        %v2385 = vlaneseq
        %v2386 = vshrl.u32 %v2385, 7
        %v2387 = vsub.s32 0, %v2386
        %v2388 = vrot.slane %v2383, %v2387
        %v2389 = vlaneseq
        %v2390 = vshrl.u32 %v2389, 7
        %v2391 = vsub.s32 1, %v2390
        %v2392 = vrot.slane %v2383, %v2391
        %v2395 = vmul.f32 %v2379, %v2388
        %v2396 = vmul.f32 %v2380, %v2392
        %v2397 = vmul.f32 %v2381, %v2388
        %v2398 = vmul.f32 %v2382, %v2392
        %v2399 = vadd.f32 %v2395, %v2396
        %2400 = vadd.xlane.f32.xlu0 %v2399
        %v2401 = vpop.xlane.xlu0 %2400
        %v2402 = vadd.f32 %v2397, %v2398
        %2403 = vadd.xlane.f32.xlu0 %v2402
        %v2404 = vpop.xlane.xlu0 %2403
        %v2405 = vld [vmem:[#allocation2] sm:$0x1]
        %v2407 = vlaneseq
        %v2408 = vshrl.u32 %v2407, 7
        %v2409 = vsub.s32 0, %v2408
        %v2410 = vrot.slane %v2405, %v2409
        %v2412 = vadd.f32 %v2401, %v2410
        %v2413 = vadd.f32 %v2404, %v2410
        %vm2414 = vcmask 7168
        %2415 = vst.msk [vmem:[%s288] sm:$0xff] %vm2414, %v2412
        %2416 = vst.msk [vmem:[%s288 + $0x8] sm:$0xff] %vm2414, %v2413
        %s2417 = sand.u32 %s141, 1
        %s2418 = sand.u32 %s141, 1
        %s2419 = smul.addr %s2418, 16
        %s2420 = scalar_lea.vmem [#allocation10], %s2419
        // Predicated region
        $region57: #{tpu_custom_call.1} parent=39 // pred_check
          %p2421 = pneg %p151
        $region58: #{tpu_custom_call.1} parent=39 // pred_check_branch
          %2423 = sbr.rel (%p2421) target = $region60
        $region59: #{tpu_custom_call.1} parent=39 // pred_region
          %s2424 = smul.u32 2, %s23
          %s2425 = ssub.s32 3, %s2424
          %p2426 = scmp.lt.s32.totalorder %s2425, 2
          %s2427 = scalar_select %p2426, %s2425, 2
          %s2428 = smul.u32 128, %s2427
          %p2429 = scmp.ne.s32.totalorder 0, %s2428
          %s2430 = smul.addr %s2424, 8
          %s2431 = scalar_lea.vmem %s5, %s2430
          // Predicated region
          $region61: #{tpu_custom_call.1} parent=59 // pred_check
            %p2432 = pneg %p2429
          $region62: #{tpu_custom_call.1} parent=59 // pred_check_branch
            %2434 = sbr.rel (%p2432) target = $region64
          $region63: #{tpu_custom_call.1} parent=59 // pred_region
            // Predicated region
            $region65: #{tpu_custom_call.1} parent=63 // pred_check
              _
            $region66: #{tpu_custom_call.1} parent=63 // pred_check_branch
              %2436 = sbr.rel (0) target = $region68
            $region67: #{tpu_custom_call.1} parent=63 // pred_region
              // Predicated region
              $region87: #{tpu_custom_call.1} parent=67 // pred_check
                _
              $region88: #{tpu_custom_call.1} parent=67 // pred_check_branch
                %2487 = sbr.rel (0) target = $region90
              $region89: #{tpu_custom_call.1} parent=67 // pred_region
                %s2488 = sshrl.u32 %s2427, 1
                // While loop
                $region91: #{tpu_custom_call.1} parent=89 // loop_pre_header
                  _
                $region92: #{tpu_custom_call.1} parent=89 // loop_header
                  %s2490 = sphi 0, %s2492
                  %p2491 = scmp.ge.s32.totalorder %s2490, %s2488
                  %s2495 = sphi 0, %s2504
                  %s2496 = sphi %s2420, %s2507
                  %s2497 = sphi %s2431, %s2508
                $region93: #{tpu_custom_call.1} parent=89 // loop_header_branch
                  %2494 = sbr.rel (%p2491) target = $region97
                $region94: #{tpu_custom_call.1} parent=89 // loop_body
                  %v2498 = vld [vmem:[%s2496] sm:$0xff]
                  %2499 = vst [vmem:[%s2497] sm:$0xff] %v2498
                  %v2500 = vld [vmem:[%s2496 + $0x8] sm:$0xff]
                  %2501 = vst [vmem:[%s2497 + $0x8] sm:$0xff] %v2500
                  %s2502 = sadd.s32 1, %s2495
                  %p2503 = scmp.ge.s32.totalorder %s2502, %s2488
                  %s2504 = scalar_select %p2503, 0, %s2502
                  %s2505 = smul.u32 %s2504, 16
                  %s2506 = smul.u32 %s2504, 16
                  %s2507 = scalar_lea.vmem %s2420, %s2505 [#allocation10]
                  %s2508 = scalar_lea.vmem %s2431, %s2506
                $region95: #{tpu_custom_call.1} parent=89 // loop_footer
                  %s2492 = sadd.s32 %s2490, 1
                $region96: #{tpu_custom_call.1} parent=89 // loop_footer_branch
                  %2489 = sbr.rel target = $region92
                $region97: #{tpu_custom_call.1} parent=89 // loop_exit
                  _
                %s2509 = sshrl.u32 %s2427, 1
                %s2510 = sand.u32 %s2427, 1
                %s2511 = smul.u32 %s2509, 2
                %s2512 = smul.u32 8, %s2511
                %s2513 = scalar_lea.vmem %s2420, %s2512 [#allocation10]
                %s2514 = smul.u32 8, %s2511
                %s2515 = scalar_lea.vmem %s2431, %s2514
                // While loop
                $region98: #{tpu_custom_call.1} parent=89 // loop_pre_header
                  _
                $region99: #{tpu_custom_call.1} parent=89 // loop_header
                  %s2517 = sphi 0, %s2519
                  %p2518 = scmp.ge.s32.totalorder %s2517, %s2510
                  %s2522 = sphi 0, %s2529
                  %s2523 = sphi %s2513, %s2532
                  %s2524 = sphi %s2515, %s2533
                $region100: #{tpu_custom_call.1} parent=89 // loop_header_branch
                  %2521 = sbr.rel (%p2518) target = $region104
                $region101: #{tpu_custom_call.1} parent=89 // loop_body
                  %v2525 = vld [vmem:[%s2523] sm:$0xff]
                  %2526 = vst [vmem:[%s2524] sm:$0xff] %v2525
                  %s2527 = sadd.s32 1, %s2522
                  %p2528 = scmp.ge.s32.totalorder %s2527, %s2510
                  %s2529 = scalar_select %p2528, 0, %s2527
                  %s2530 = smul.u32 %s2529, 8
                  %s2531 = smul.u32 %s2529, 8
                  %s2532 = scalar_lea.vmem %s2513, %s2530 [#allocation10]
                  %s2533 = scalar_lea.vmem %s2515, %s2531
                $region102: #{tpu_custom_call.1} parent=89 // loop_footer
                  %s2519 = sadd.s32 %s2517, 1
                $region103: #{tpu_custom_call.1} parent=89 // loop_footer_branch
                  %2516 = sbr.rel target = $region99
                $region104: #{tpu_custom_call.1} parent=89 // loop_exit
                  _
              $region90: #{tpu_custom_call.1} parent=67 // pred_fallthru
                _
              // Predicated region
              $region105: #{tpu_custom_call.1} parent=67 // pred_check
                _
              $region106: #{tpu_custom_call.1} parent=67 // pred_check_branch
                %2535 = sbr.rel target = $region108
              $region107: #{tpu_custom_call.1} parent=67 // pred_region
                _
              $region108: #{tpu_custom_call.1} parent=67 // pred_fallthru
                _
            $region68: #{tpu_custom_call.1} parent=63 // pred_fallthru
              _
            // Predicated region
            $region69: #{tpu_custom_call.1} parent=63 // pred_check
              _
            $region70: #{tpu_custom_call.1} parent=63 // pred_check_branch
              %2438 = sbr.rel target = $region72
            $region71: #{tpu_custom_call.1} parent=63 // pred_region
              %s2440 = sshrl.u32 %s2427, 1
              // While loop
              $region73: #{tpu_custom_call.1} parent=71 // loop_pre_header
                _
              $region74: #{tpu_custom_call.1} parent=71 // loop_header
                %s2442 = sphi 0, %s2444
                %p2443 = scmp.ge.s32.totalorder %s2442, %s2440
                %s2447 = sphi 0, %s2456
                %s2448 = sphi %s2420, %s2459
                %s2449 = sphi %s2431, %s2460
              $region75: #{tpu_custom_call.1} parent=71 // loop_header_branch
                %2446 = sbr.rel (%p2443) target = $region79
              $region76: #{tpu_custom_call.1} parent=71 // loop_body
                %v2450 = vld [vmem:[%s2448] sm:$0xff]
                %2451 = vst [vmem:[%s2449] sm:$0xff] %v2450
                %v2452 = vld [vmem:[%s2448 + $0x8] sm:$0xff]
                %2453 = vst [vmem:[%s2449 + $0x8] sm:$0xff] %v2452
                %s2454 = sadd.s32 1, %s2447
                %p2455 = scmp.ge.s32.totalorder %s2454, %s2440
                %s2456 = scalar_select %p2455, 0, %s2454
                %s2457 = smul.u32 %s2456, 16
                %s2458 = smul.u32 %s2456, 16
                %s2459 = scalar_lea.vmem %s2420, %s2457 [#allocation10]
                %s2460 = scalar_lea.vmem %s2431, %s2458
              $region77: #{tpu_custom_call.1} parent=71 // loop_footer
                %s2444 = sadd.s32 %s2442, 1
              $region78: #{tpu_custom_call.1} parent=71 // loop_footer_branch
                %2441 = sbr.rel target = $region74
              $region79: #{tpu_custom_call.1} parent=71 // loop_exit
                _
              %s2461 = sshrl.u32 %s2427, 1
              %s2462 = sand.u32 %s2427, 1
              %s2463 = smul.u32 %s2461, 2
              %s2464 = smul.u32 8, %s2463
              %s2465 = scalar_lea.vmem %s2420, %s2464 [#allocation10]
              %s2466 = smul.u32 8, %s2463
              %s2467 = scalar_lea.vmem %s2431, %s2466
              // While loop
              $region80: #{tpu_custom_call.1} parent=71 // loop_pre_header
                _
              $region81: #{tpu_custom_call.1} parent=71 // loop_header
                %s2469 = sphi 0, %s2471
                %p2470 = scmp.ge.s32.totalorder %s2469, %s2462
                %s2474 = sphi 0, %s2481
                %s2475 = sphi %s2465, %s2484
                %s2476 = sphi %s2467, %s2485
              $region82: #{tpu_custom_call.1} parent=71 // loop_header_branch
                %2473 = sbr.rel (%p2470) target = $region86
              $region83: #{tpu_custom_call.1} parent=71 // loop_body
                %v2477 = vld [vmem:[%s2475] sm:$0xff]
                %2478 = vst [vmem:[%s2476] sm:$0xff] %v2477
                %s2479 = sadd.s32 1, %s2474
                %p2480 = scmp.ge.s32.totalorder %s2479, %s2462
                %s2481 = scalar_select %p2480, 0, %s2479
                %s2482 = smul.u32 %s2481, 8
                %s2483 = smul.u32 %s2481, 8
                %s2484 = scalar_lea.vmem %s2465, %s2482 [#allocation10]
                %s2485 = scalar_lea.vmem %s2467, %s2483
              $region84: #{tpu_custom_call.1} parent=71 // loop_footer
                %s2471 = sadd.s32 %s2469, 1
              $region85: #{tpu_custom_call.1} parent=71 // loop_footer_branch
                %2468 = sbr.rel target = $region81
              $region86: #{tpu_custom_call.1} parent=71 // loop_exit
                _
            $region72: #{tpu_custom_call.1} parent=63 // pred_fallthru
              _
          $region64: #{tpu_custom_call.1} parent=59 // pred_fallthru
            _
          %2536 = vnop
        $region60: #{tpu_custom_call.1} parent=39 // pred_fallthru
          _
      $region40: #{tpu_custom_call.1} parent=5 // pred_fallthru
        _
      %p2537 = scmp.le.s32.totalorder 2, %s18
      // Predicated region
      $region109: #{tpu_custom_call.1} parent=5 // pred_check
        %p2538 = pneg %p2537
      $region110: #{tpu_custom_call.1} parent=5 // pred_check_branch
        %2540 = sbr.rel (%p2538) target = $region112
      $region111: #{tpu_custom_call.1} parent=5 // pred_region
        %s2541 = ssub.s32 %s18, 2
        // Predicated region
        $region113: #{tpu_custom_call.1} parent=111 // pred_check
          %p2542 = pneg %p157
        $region114: #{tpu_custom_call.1} parent=111 // pred_check_branch
          %2544 = sbr.rel (%p2542) target = $region116
        $region115: #{tpu_custom_call.1} parent=111 // pred_region
          %s2545 = sand.u32 %s142, 1
          %s2546 = sand.u32 %s142, 1
          %s2547 = smul.addr %s2546, 16
          %s2548 = scalar_lea.vmem [#allocation10], %s2547
        $region116: #{tpu_custom_call.1} parent=111 // pred_fallthru
          _
      $region112: #{tpu_custom_call.1} parent=5 // pred_fallthru
        _
    $region6: #{tpu_custom_call.1} parent=1 // loop_footer
      %s22 = sadd.s32 1, %s18
    $region7: #{tpu_custom_call.1} parent=1 // loop_footer_branch
      %17 = sbr.rel target = $region3
    $region8: #{tpu_custom_call.1} parent=1 // loop_exit
      _
    %2549 = vsyncpa [#allocation4], 1
    %s2550 = scalar_lea.sflag [#allocation4], 1
    %2551 = vsyncpa %s2550, 1
    %2552 = vsyncpa [#allocation6], 1
    %2553 = vsyncpa [#allocation9], 1

</llo_original>
